<compile_context>
chip_gen: v7x
topology: tpu7x:2x2x1
jax: 0.10.0
libtpu: 0.0.40
codegen_flags: <defaults>
</compile_context>

<pallas_src>
import jax
import jax.numpy as jnp
from jax.experimental import pallas as pl
from jax.experimental.pallas import tpu as pltpu


# (cin, cout, stride) for the 8 RepConvBN layers of DetailBranch.
_DETAIL_BRANCH_CFG = (
    (3, 64, 2), (64, 64, 1),                      # stage2
    (64, 64, 2), (64, 64, 1), (64, 64, 1),        # stage4
    (64, 128, 2), (128, 128, 1), (128, 128, 1),   # stage16
)
_EPS = 1e-5
_TM_MAX = 512      # im2col rows per grid step (review: 512-2048 sweet spot)
_LANES = 128       # TPU lane width; outputs are packed to this store width


def _round_up(x, m):
    return ((x + m - 1) // m) * m


# ----------------------------------------------------------------------------
# Pallas kernel: fused (patches @ folded-weight) + bias + ReLU
# ----------------------------------------------------------------------------
def _matmul_bias_relu_kernel(p_ref, w_ref, b_ref, o_ref):
    """p_ref: (TMr, Kd) bf16, w_ref: (Kd, 128) bf16, b_ref: (1, 128) f32,
    o_ref: (TMr, 128) bf16."""
    acc = jnp.dot(p_ref[...], w_ref[...], preferred_element_type=jnp.float32)
    o_ref[...] = jnp.maximum(acc + b_ref[...], 0.0).astype(o_ref.dtype)


# ----------------------------------------------------------------------------
# Wrapper-side data plumbing (pure layout / weight prep, no compute hoisting)
# ----------------------------------------------------------------------------
def _extract_patches(x_nhwc, ksize, stride, pad):
    """im2col: (N*Ho*Wo, ksize*ksize*C), patch-row order (kh, kw, ci)."""
    n, h, w, c = x_nhwc.shape
    xp = jnp.pad(x_nhwc, ((0, 0), (pad, pad), (pad, pad), (0, 0)))
    ho = (h + 2 * pad - ksize) // stride + 1
    wo = (w + 2 * pad - ksize) // stride + 1
    cols = []
    for kh in range(ksize):
        for kw in range(ksize):
            cols.append(
                xp[:, kh:kh + stride * ho:stride, kw:kw + stride * wo:stride, :])
    patches = jnp.concatenate(cols, axis=-1)          # (N, Ho, Wo, K*K*C)
    return patches.reshape(n * ho * wo, ksize * ksize * c), (n, ho, wo)


def _fold_bn_into_weight(w_oihw, gamma, beta, mean, var, eps=_EPS):
    """Fold BN scale/shift into a (Kdim, Cout) matmul weight + bias."""
    cout = w_oihw.shape[0]
    inv_std = gamma / jnp.sqrt(var + eps)
    # OIHW -> (KH, KW, Cin, Cout) to match the (kh, kw, ci) patch-row order.
    wmat = jnp.transpose(w_oihw, (2, 3, 1, 0)).reshape(-1, cout)
    wmat = wmat * inv_std[None, :]                    # scale folded into columns
    bias = beta - mean * inv_std
    return wmat, bias


def _pack_lane_dense(wmat, bias, pack):
    """Block-diagonal weight so `pack` output rows share one 128-lane row."""
    kdim, cout = wmat.shape
    if pack == 1:
        return wmat, bias[None, :]
    wp = jnp.zeros((pack * kdim, pack * cout), wmat.dtype)
    for p in range(pack):
        wp = wp.at[p * kdim:(p + 1) * kdim, p * cout:(p + 1) * cout].set(wmat)
    return wp, jnp.tile(bias, pack)[None, :]


def conv3x3_bn_relu(x_nhwc, layer_params, *, stride):
    """Conv2d(3x3, bias=False) + folded BN + ReLU via a tiled Pallas matmul."""
    w = layer_params["w"]                             # (Cout, Cin, 3, 3) f32
    cout, cin, kh, kw = w.shape
    assert kh == kw == 3

    patches, (n, ho, wo) = _extract_patches(
        x_nhwc.astype(jnp.bfloat16), kh, stride, pad=1)
    m, kdim = patches.shape

    wmat, bias = _fold_bn_into_weight(
        w, layer_params["gamma"], layer_params["beta"],
        layer_params["mean"], layer_params["var"])

    # Pack rows so the stored output last dim is a full 128 lanes.
    pack = _LANES // cout if (cout < _LANES and _LANES % cout == 0) else 1
    row_align = 16 * pack                             # bf16-friendly sublanes
    tm = _round_up(min(_TM_MAX, _round_up(m, row_align)), row_align)
    m_pad = _round_up(m, tm)
    if m_pad != m:
        patches = jnp.pad(patches, ((0, m_pad - m), (0, 0)))

    kd, cd = pack * kdim, pack * cout
    tmr = tm // pack
    m_rows = m_pad // pack
    patches = patches.reshape(m_rows, kd)             # row-major: free reshape

    wp, bp = _pack_lane_dense(wmat, bias, pack)
    wp = wp.astype(jnp.bfloat16)
    bp = bp.astype(jnp.float32)

    out = pl.pallas_call(
        _matmul_bias_relu_kernel,
        out_shape=jax.ShapeDtypeStruct((m_rows, cd), jnp.bfloat16),
        grid=(m_rows // tmr,),
        in_specs=[
            pl.BlockSpec((tmr, kd), lambda i: (i, 0)),   # streamed over M
            pl.BlockSpec((kd, cd), lambda i: (0, 0)),    # resident weight
            pl.BlockSpec((1, cd), lambda i: (0, 0)),     # resident bias
        ],
        out_specs=pl.BlockSpec((tmr, cd), lambda i: (i, 0)),
        compiler_params=pltpu.CompilerParams(
            dimension_semantics=("parallel",)),          # megacore-shard M axis
    )(patches, wp, bp)

    out = out.reshape(m_pad, cout)[:m]                # undo lane packing (free)
    return out.reshape(n, ho, wo, cout)


# ----------------------------------------------------------------------------
# Parameter construction (deterministic, fresh init; BN stats = identity)
# ----------------------------------------------------------------------------
def init_detail_branch_params(key):
    params = []
    keys = jax.random.split(key, len(_DETAIL_BRANCH_CFG))
    for k, (cin, cout, _) in zip(keys, _DETAIL_BRANCH_CFG):
        fan_in = cin * 9
        params.append({
            "w": jax.random.normal(k, (cout, cin, 3, 3), jnp.float32)
                 * (2.0 / fan_in) ** 0.5,
            "gamma": jnp.ones((cout,), jnp.float32),
            "beta": jnp.zeros((cout,), jnp.float32),
            "mean": jnp.zeros((cout,), jnp.float32),
            "var": jnp.ones((cout,), jnp.float32),
        })
    return params


# ----------------------------------------------------------------------------
# DetailBranch forward (matches the PyTorch module structure)
# ----------------------------------------------------------------------------
@jax.jit
def detail_branch_forward(params, x_nchw):
    x = jnp.transpose(x_nchw, (0, 2, 3, 1))           # NCHW -> NHWC
    for p, (_, _, stride) in zip(params, _DETAIL_BRANCH_CFG):
        x = conv3x3_bn_relu(x, p, stride=stride)
    return jnp.transpose(x, (0, 3, 1, 2)).astype(jnp.float32)   # NHWC -> NCHW


# ----------------------------------------------------------------------------
# Pure-JAX reference (f32) for a tolerance check
# ----------------------------------------------------------------------------
def _reference_forward(params, x_nchw):
    x = x_nchw.astype(jnp.float32)
    for p, (_, _, stride) in zip(params, _DETAIL_BRANCH_CFG):
        x = jax.lax.conv_general_dilated(
            x, p["w"], window_strides=(stride, stride),
            padding=((1, 1), (1, 1)),
            dimension_numbers=("NCHW", "OIHW", "NCHW"))
        inv = p["gamma"] / jnp.sqrt(p["var"] + _EPS)
        x = x * inv[None, :, None, None] \
            + (p["beta"] - p["mean"] * inv)[None, :, None, None]
        x = jnp.maximum(x, 0.0)
    return x


# ----------------------------------------------------------------------------
if __name__ == "__main__":
    key = jax.random.PRNGKey(0)
    k_param, k_x = jax.random.split(key)

    params = init_detail_branch_params(k_param)
    # Small deterministic input, PyTorch NCHW convention: (N=2, C=3, H=16, W=16)
    x = jax.random.normal(k_x, (2, 3, 16, 16), jnp.float32)

    y = jax.block_until_ready(detail_branch_forward(params, x))

    expected_shape = (2, 128, 2, 2)   # three stride-2 stages: 16 -> 8 -> 4 -> 2
    assert y.shape == expected_shape, (y.shape, expected_shape)
    assert bool(jnp.all(jnp.isfinite(y)))

    # bf16-tolerance check against the pure-JAX f32 reference.
    y_ref = jax.block_until_ready(_reference_forward(params, x))
    rel = jnp.linalg.norm(y - y_ref) / (jnp.linalg.norm(y_ref) + 1e-8)
    assert float(rel) < 5e-2, float(rel)

    print("KERNEL_OK")
</pallas_src>

<mosaic_0001>
module attributes {stable_mosaic.version = 11 : i64} {
  func.func @_matmul_bias_relu_kernel(%arg0: i32, %arg1: memref<64x54xbf16, #tpu.memory_space<vmem>>, %arg2: memref<54x128xbf16, #tpu.memory_space<vmem>>, %arg3: memref<1x128xf32, #tpu.memory_space<vmem>>, %arg4: memref<64x128xbf16, #tpu.memory_space<vmem>>) attributes {dimension_semantics = [#tpu.dimension_semantics<parallel>], iteration_bounds = array<i64: 1>, scalar_prefetch = 0 : i64, scratch_operands = 0 : i64, tpu.core_type = #tpu.core_type<tc>, window_params = [{transform_indices = @transform_0, window_bounds = array<i64: 64, 54>}, {pipeline_mode = #tpu.pipeline_mode<synchronous>, transform_indices = @transform_1, window_bounds = array<i64: 54, 128>}, {pipeline_mode = #tpu.pipeline_mode<synchronous>, transform_indices = @transform_2, window_bounds = array<i64: 1, 128>}, {transform_indices = @transform_3, window_bounds = array<i64: 64, 128>}]} {
    %c0 = arith.constant 0 : index
    %c0_0 = arith.constant 0 : index
    %0 = vector.load %arg1[%c0, %c0_0] : memref<64x54xbf16, #tpu.memory_space<vmem>>, vector<64x54xbf16>
    %c0_1 = arith.constant 0 : index
    %c0_2 = arith.constant 0 : index
    %1 = vector.load %arg2[%c0_1, %c0_2] : memref<54x128xbf16, #tpu.memory_space<vmem>>, vector<54x128xbf16>
    %cst = arith.constant dense<0.000000e+00> : vector<64x128xf32>
    %2 = tpu.matmul %0, %1, %cst {dimension_numbers = #tpu.dot_dimension_numbers<[1], [0], [0], [1], [0, 0, 1, 1], [], []>} : vector<64x54xbf16>, vector<54x128xbf16>, vector<64x128xf32> -> vector<64x128xf32>
    %c0_3 = arith.constant 0 : index
    %c0_4 = arith.constant 0 : index
    %3 = vector.load %arg3[%c0_3, %c0_4] : memref<1x128xf32, #tpu.memory_space<vmem>>, vector<1x128xf32>
    %4 = vector.broadcast %3 : vector<1x128xf32> to vector<64x128xf32>
    %5 = arith.addf %2, %4 : vector<64x128xf32>
    %cst_5 = arith.constant 0.000000e+00 : f32
    %6 = vector.broadcast %cst_5 : f32 to vector<64x128xf32>
    %7 = arith.maximumf %5, %6 : vector<64x128xf32>
    %8 = arith.truncf %7 : vector<64x128xf32> to vector<64x128xbf16>
    %c0_6 = arith.constant 0 : index
    %c0_7 = arith.constant 0 : index
    %9 = vector.load %arg4[%c0_6, %c0_7] : memref<64x128xbf16, #tpu.memory_space<vmem>>, vector<64x128xbf16>
    tpu.vector_store %arg4[%c0_6, %c0_7], %8 {strides = array<i32>} : memref<64x128xbf16, #tpu.memory_space<vmem>>, vector<64x128xbf16>,
    return
  }
  func.func @transform_0(%arg0: i32) -> (i32, i32) {
    %c0_i32 = arith.constant 0 : i32
    %c0_i32_0 = arith.constant 0 : i32
    return %arg0, %c0_i32 : i32, i32
  }
  func.func @transform_1(%arg0: i32) -> (i32, i32) {
    %c0_i32 = arith.constant 0 : i32
    %c0_i32_0 = arith.constant 0 : i32
    %c0_i32_1 = arith.constant 0 : i32
    return %c0_i32, %c0_i32_0 : i32, i32
  }
  func.func @transform_2(%arg0: i32) -> (i32, i32) {
    %c0_i32 = arith.constant 0 : i32
    %c0_i32_0 = arith.constant 0 : i32
    %c0_i32_1 = arith.constant 0 : i32
    return %c0_i32, %c0_i32_0 : i32, i32
  }
  func.func @transform_3(%arg0: i32) -> (i32, i32) {
    %c0_i32 = arith.constant 0 : i32
    %c0_i32_0 = arith.constant 0 : i32
    return %arg0, %c0_i32 : i32, i32
  }
}

module attributes {stable_mosaic.version = 11 : i64} {
  func.func @_matmul_bias_relu_kernel(%arg0: i32, %arg1: memref<64x1152xbf16, #tpu.memory_space<vmem>>, %arg2: memref<1152x128xbf16, #tpu.memory_space<vmem>>, %arg3: memref<1x128xf32, #tpu.memory_space<vmem>>, %arg4: memref<64x128xbf16, #tpu.memory_space<vmem>>) attributes {dimension_semantics = [#tpu.dimension_semantics<parallel>], iteration_bounds = array<i64: 1>, scalar_prefetch = 0 : i64, scratch_operands = 0 : i64, tpu.core_type = #tpu.core_type<tc>, window_params = [{transform_indices = @transform_0, window_bounds = array<i64: 64, 1152>}, {pipeline_mode = #tpu.pipeline_mode<synchronous>, transform_indices = @transform_1, window_bounds = array<i64: 1152, 128>}, {pipeline_mode = #tpu.pipeline_mode<synchronous>, transform_indices = @transform_2, window_bounds = array<i64: 1, 128>}, {transform_indices = @transform_3, window_bounds = array<i64: 64, 128>}]} {
    %c0 = arith.constant 0 : index
    %c0_0 = arith.constant 0 : index
    %0 = vector.load %arg1[%c0, %c0_0] : memref<64x1152xbf16, #tpu.memory_space<vmem>>, vector<64x1152xbf16>
    %c0_1 = arith.constant 0 : index
    %c0_2 = arith.constant 0 : index
    %1 = vector.load %arg2[%c0_1, %c0_2] : memref<1152x128xbf16, #tpu.memory_space<vmem>>, vector<1152x128xbf16>
    %cst = arith.constant dense<0.000000e+00> : vector<64x128xf32>
    %2 = tpu.matmul %0, %1, %cst {dimension_numbers = #tpu.dot_dimension_numbers<[1], [0], [0], [1], [0, 0, 1, 1], [], []>} : vector<64x1152xbf16>, vector<1152x128xbf16>, vector<64x128xf32> -> vector<64x128xf32>
    %c0_3 = arith.constant 0 : index
    %c0_4 = arith.constant 0 : index
    %3 = vector.load %arg3[%c0_3, %c0_4] : memref<1x128xf32, #tpu.memory_space<vmem>>, vector<1x128xf32>
    %4 = vector.broadcast %3 : vector<1x128xf32> to vector<64x128xf32>
    %5 = arith.addf %2, %4 : vector<64x128xf32>
    %cst_5 = arith.constant 0.000000e+00 : f32
    %6 = vector.broadcast %cst_5 : f32 to vector<64x128xf32>
    %7 = arith.maximumf %5, %6 : vector<64x128xf32>
    %8 = arith.truncf %7 : vector<64x128xf32> to vector<64x128xbf16>
    %c0_6 = arith.constant 0 : index
    %c0_7 = arith.constant 0 : index
    %9 = vector.load %arg4[%c0_6, %c0_7] : memref<64x128xbf16, #tpu.memory_space<vmem>>, vector<64x128xbf16>
    tpu.vector_store %arg4[%c0_6, %c0_7], %8 {strides = array<i32>} : memref<64x128xbf16, #tpu.memory_space<vmem>>, vector<64x128xbf16>,
    return
  }
  func.func @transform_0(%arg0: i32) -> (i32, i32) {
    %c0_i32 = arith.constant 0 : i32
    %c0_i32_0 = arith.constant 0 : i32
    return %arg0, %c0_i32 : i32, i32
  }
  func.func @transform_1(%arg0: i32) -> (i32, i32) {
    %c0_i32 = arith.constant 0 : i32
    %c0_i32_0 = arith.constant 0 : i32
    %c0_i32_1 = arith.constant 0 : i32
    return %c0_i32, %c0_i32_0 : i32, i32
  }
  func.func @transform_2(%arg0: i32) -> (i32, i32) {
    %c0_i32 = arith.constant 0 : i32
    %c0_i32_0 = arith.constant 0 : i32
    %c0_i32_1 = arith.constant 0 : i32
    return %c0_i32, %c0_i32_0 : i32, i32
  }
  func.func @transform_3(%arg0: i32) -> (i32, i32) {
    %c0_i32 = arith.constant 0 : i32
    %c0_i32_0 = arith.constant 0 : i32
    return %arg0, %c0_i32 : i32, i32
  }
}

module attributes {stable_mosaic.version = 11 : i64} {
  func.func @_matmul_bias_relu_kernel(%arg0: i32, %arg1: memref<16x1152xbf16, #tpu.memory_space<vmem>>, %arg2: memref<1152x128xbf16, #tpu.memory_space<vmem>>, %arg3: memref<1x128xf32, #tpu.memory_space<vmem>>, %arg4: memref<16x128xbf16, #tpu.memory_space<vmem>>) attributes {dimension_semantics = [#tpu.dimension_semantics<parallel>], iteration_bounds = array<i64: 1>, scalar_prefetch = 0 : i64, scratch_operands = 0 : i64, tpu.core_type = #tpu.core_type<tc>, window_params = [{transform_indices = @transform_0, window_bounds = array<i64: 16, 1152>}, {pipeline_mode = #tpu.pipeline_mode<synchronous>, transform_indices = @transform_1, window_bounds = array<i64: 1152, 128>}, {pipeline_mode = #tpu.pipeline_mode<synchronous>, transform_indices = @transform_2, window_bounds = array<i64: 1, 128>}, {transform_indices = @transform_3, window_bounds = array<i64: 16, 128>}]} {
    %c0 = arith.constant 0 : index
    %c0_0 = arith.constant 0 : index
    %0 = vector.load %arg1[%c0, %c0_0] : memref<16x1152xbf16, #tpu.memory_space<vmem>>, vector<16x1152xbf16>
    %c0_1 = arith.constant 0 : index
    %c0_2 = arith.constant 0 : index
    %1 = vector.load %arg2[%c0_1, %c0_2] : memref<1152x128xbf16, #tpu.memory_space<vmem>>, vector<1152x128xbf16>
    %cst = arith.constant dense<0.000000e+00> : vector<16x128xf32>
    %2 = tpu.matmul %0, %1, %cst {dimension_numbers = #tpu.dot_dimension_numbers<[1], [0], [0], [1], [0, 0, 1, 1], [], []>} : vector<16x1152xbf16>, vector<1152x128xbf16>, vector<16x128xf32> -> vector<16x128xf32>
    %c0_3 = arith.constant 0 : index
    %c0_4 = arith.constant 0 : index
    %3 = vector.load %arg3[%c0_3, %c0_4] : memref<1x128xf32, #tpu.memory_space<vmem>>, vector<1x128xf32>
    %4 = vector.broadcast %3 : vector<1x128xf32> to vector<16x128xf32>
    %5 = arith.addf %2, %4 : vector<16x128xf32>
    %cst_5 = arith.constant 0.000000e+00 : f32
    %6 = vector.broadcast %cst_5 : f32 to vector<16x128xf32>
    %7 = arith.maximumf %5, %6 : vector<16x128xf32>
    %8 = arith.truncf %7 : vector<16x128xf32> to vector<16x128xbf16>
    %c0_6 = arith.constant 0 : index
    %c0_7 = arith.constant 0 : index
    %9 = vector.load %arg4[%c0_6, %c0_7] : memref<16x128xbf16, #tpu.memory_space<vmem>>, vector<16x128xbf16>
    tpu.vector_store %arg4[%c0_6, %c0_7], %8 {strides = array<i32>} : memref<16x128xbf16, #tpu.memory_space<vmem>>, vector<16x128xbf16>,
    return
  }
  func.func @transform_0(%arg0: i32) -> (i32, i32) {
    %c0_i32 = arith.constant 0 : i32
    %c0_i32_0 = arith.constant 0 : i32
    return %arg0, %c0_i32 : i32, i32
  }
  func.func @transform_1(%arg0: i32) -> (i32, i32) {
    %c0_i32 = arith.constant 0 : i32
    %c0_i32_0 = arith.constant 0 : i32
    %c0_i32_1 = arith.constant 0 : i32
    return %c0_i32, %c0_i32_0 : i32, i32
  }
  func.func @transform_2(%arg0: i32) -> (i32, i32) {
    %c0_i32 = arith.constant 0 : i32
    %c0_i32_0 = arith.constant 0 : i32
    %c0_i32_1 = arith.constant 0 : i32
    return %c0_i32, %c0_i32_0 : i32, i32
  }
  func.func @transform_3(%arg0: i32) -> (i32, i32) {
    %c0_i32 = arith.constant 0 : i32
    %c0_i32_0 = arith.constant 0 : i32
    return %arg0, %c0_i32 : i32, i32
  }
}

module attributes {stable_mosaic.version = 11 : i64} {
  func.func @_matmul_bias_relu_kernel(%arg0: i32, %arg1: memref<16x576xbf16, #tpu.memory_space<vmem>>, %arg2: memref<576x128xbf16, #tpu.memory_space<vmem>>, %arg3: memref<1x128xf32, #tpu.memory_space<vmem>>, %arg4: memref<16x128xbf16, #tpu.memory_space<vmem>>) attributes {dimension_semantics = [#tpu.dimension_semantics<parallel>], iteration_bounds = array<i64: 1>, scalar_prefetch = 0 : i64, scratch_operands = 0 : i64, tpu.core_type = #tpu.core_type<tc>, window_params = [{transform_indices = @transform_0, window_bounds = array<i64: 16, 576>}, {pipeline_mode = #tpu.pipeline_mode<synchronous>, transform_indices = @transform_1, window_bounds = array<i64: 576, 128>}, {pipeline_mode = #tpu.pipeline_mode<synchronous>, transform_indices = @transform_2, window_bounds = array<i64: 1, 128>}, {transform_indices = @transform_3, window_bounds = array<i64: 16, 128>}]} {
    %c0 = arith.constant 0 : index
    %c0_0 = arith.constant 0 : index
    %0 = vector.load %arg1[%c0, %c0_0] : memref<16x576xbf16, #tpu.memory_space<vmem>>, vector<16x576xbf16>
    %c0_1 = arith.constant 0 : index
    %c0_2 = arith.constant 0 : index
    %1 = vector.load %arg2[%c0_1, %c0_2] : memref<576x128xbf16, #tpu.memory_space<vmem>>, vector<576x128xbf16>
    %cst = arith.constant dense<0.000000e+00> : vector<16x128xf32>
    %2 = tpu.matmul %0, %1, %cst {dimension_numbers = #tpu.dot_dimension_numbers<[1], [0], [0], [1], [0, 0, 1, 1], [], []>} : vector<16x576xbf16>, vector<576x128xbf16>, vector<16x128xf32> -> vector<16x128xf32>
    %c0_3 = arith.constant 0 : index
    %c0_4 = arith.constant 0 : index
    %3 = vector.load %arg3[%c0_3, %c0_4] : memref<1x128xf32, #tpu.memory_space<vmem>>, vector<1x128xf32>
    %4 = vector.broadcast %3 : vector<1x128xf32> to vector<16x128xf32>
    %5 = arith.addf %2, %4 : vector<16x128xf32>
    %cst_5 = arith.constant 0.000000e+00 : f32
    %6 = vector.broadcast %cst_5 : f32 to vector<16x128xf32>
    %7 = arith.maximumf %5, %6 : vector<16x128xf32>
    %8 = arith.truncf %7 : vector<16x128xf32> to vector<16x128xbf16>
    %c0_6 = arith.constant 0 : index
    %c0_7 = arith.constant 0 : index
    %9 = vector.load %arg4[%c0_6, %c0_7] : memref<16x128xbf16, #tpu.memory_space<vmem>>, vector<16x128xbf16>
    tpu.vector_store %arg4[%c0_6, %c0_7], %8 {strides = array<i32>} : memref<16x128xbf16, #tpu.memory_space<vmem>>, vector<16x128xbf16>,
    return
  }
  func.func @transform_0(%arg0: i32) -> (i32, i32) {
    %c0_i32 = arith.constant 0 : i32
    %c0_i32_0 = arith.constant 0 : i32
    return %arg0, %c0_i32 : i32, i32
  }
  func.func @transform_1(%arg0: i32) -> (i32, i32) {
    %c0_i32 = arith.constant 0 : i32
    %c0_i32_0 = arith.constant 0 : i32
    %c0_i32_1 = arith.constant 0 : i32
    return %c0_i32, %c0_i32_0 : i32, i32
  }
  func.func @transform_2(%arg0: i32) -> (i32, i32) {
    %c0_i32 = arith.constant 0 : i32
    %c0_i32_0 = arith.constant 0 : i32
    %c0_i32_1 = arith.constant 0 : i32
    return %c0_i32, %c0_i32_0 : i32, i32
  }
  func.func @transform_3(%arg0: i32) -> (i32, i32) {
    %c0_i32 = arith.constant 0 : i32
    %c0_i32_0 = arith.constant 0 : i32
    return %arg0, %c0_i32 : i32, i32
  }
}

</mosaic_0001>

<llo_original>
// kernel: tile.28
$region0: #{tile.28}
  #allocation0 [shape = 's32[1]{0}', space=sflag, size = 0x4, scoped, tag = 'scoped memory for tile.28']
  %s0 = inlined_call_operand.vmem [shape: f32[64], index: 0, kind: input, shape index: {}]
  %s1 = inlined_call_operand.vmem [shape: f32[2,64], index: 1, kind: output, shape index: {}]
  // Predicated region
  $region2: #{tile.28} parent=0 // pred_check
    _
  $region3: #{tile.28} parent=0 // pred_check_branch
    %3 = sbr.rel (0) target = $region5
  $region4: #{tile.28} parent=0 // pred_region
    _
  $region5: #{tile.28} parent=0 // pred_fallthru
    _
  %v4 = vld [vmem:[%s0] ss:$0 sm:$0xff]
  %5 = vst [vmem:[%s1] sm:$0x3] %v4

// kernel: tile.29
$region0: #{tile.29}
  %s0 = inlined_call_operand.vmem [shape: f32[2,64], index: 0, kind: input, shape index: {}]
  %s1 = inlined_call_operand.vmem [shape: f32[1,128], index: 1, kind: output, shape index: {}]
  $region1: #{tile.29} parent=0
    #allocation0 [shape = 'u8[4096]{0}', space=vmem, size = 0x1000, scoped, tag = 'scoped mem for output reshape']
    #allocation1 [shape = 'u8[4096]{0}', space=vmem, size = 0x1000, scoped, tag = 'scoped mem for input reshape']
    %s3 = sshllo.u32 0, 2
    %v4 = vld [vmem:[%s0] sm:%s3]
    %5 = vst [vmem:[#allocation1] sm:%s3] %v4
    %v6 = vld [vmem:[#allocation1] sm:$0x1]
    %vm7 = vcmask 523264
    %8 = vst.msk [vmem:[#allocation0] sm:$0x1] %vm7, %v6
    %s9 = scalar_lea.vmem [#allocation1], 1
    %v10 = vld [vmem:[%s9] sm:$0x1]
    %11 = vrot.lane.b32.xlu0 %v10, 64
    %v12 = vpop.permute.xlu0 %11
    %vm13 = vcmask 1048064
    %14 = vst.msk [vmem:[#allocation0] sm:$0x1] %vm13, %v12
    %s16 = sshllo.u32 0, 1
    %v18 = vld [vmem:[#allocation0] sm:%s16]
    %s19 = sshllo.u32 0, 1
    %20 = vst [vmem:[%s1] sm:%s19] %v18

// kernel: detail_branch_forward.8
$region0: #{detail_branch_forward.8}
  #allocation0 [shape = 'u32[]', space=smem, size = 0x4, offset = 0x4, fixed_abs, tag = 'smem constant byte address 0x4 - core index']
  #allocation1 [shape = 'u32[144,128]{1,0:T(1,128)}', space=vmem, size = 0x12000, scoped, tag = 'internal scratch']
  %s0 = inlined_call_operand.vmem [shape: bf16[64,54], index: 0, kind: input, shape index: {}]
  %s1 = inlined_call_operand.vmem [shape: bf16[54,128], index: 1, kind: input, shape index: {}]
  %s2 = inlined_call_operand.vmem [shape: f32[1,128], index: 2, kind: input, shape index: {}]
  %s3 = inlined_call_operand.vmem [shape: bf16[64,128], index: 3, kind: output, shape index: {}]
  %s4 = sld [smem:[#allocation0]]
  $region22: #{detail_branch_forward.8} parent=0
    _
  %s6 = ssub.s32 1, %s4
  %s7 = scalar_select 0, %s6, %s4
  // Predicated region
  $region2: #{detail_branch_forward.8} parent=0 // pred_check
    _
  $region3: #{detail_branch_forward.8} parent=0 // pred_check_branch
    %9 = sbr.rel (0) target = $region5
  $region4: #{detail_branch_forward.8} parent=0 // pred_region
    _
  $region5: #{detail_branch_forward.8} parent=0 // pred_fallthru
    _
  // Predicated region
  $region6: #{detail_branch_forward.8} parent=0 // pred_check
    _
  $region7: #{detail_branch_forward.8} parent=0 // pred_check_branch
    %11 = sbr.rel (0) target = $region9
  $region8: #{detail_branch_forward.8} parent=0 // pred_region
    _
  $region9: #{detail_branch_forward.8} parent=0 // pred_fallthru
    _
  // Predicated region
  $region10: #{detail_branch_forward.8} parent=0 // pred_check
    _
  $region11: #{detail_branch_forward.8} parent=0 // pred_check_branch
    %13 = sbr.rel (0) target = $region13
  $region12: #{detail_branch_forward.8} parent=0 // pred_region
    _
  $region13: #{detail_branch_forward.8} parent=0 // pred_fallthru
    _
  %v15 = vld [vmem:[%s0] sm:$0xf]
  %v16 = vld [vmem:[%s0 + $0x4] sm:$0xf]
  %v17 = vld [vmem:[%s0 + $0x8] sm:$0xf]
  %v18 = vld [vmem:[%s0 + $0xc] sm:$0xf]
  %v19 = vld [vmem:[%s0 + $0x10] sm:$0xf]
  %v20 = vld [vmem:[%s0 + $0x14] sm:$0xf]
  %v21 = vld [vmem:[%s0 + $0x18] sm:$0xf]
  %v22 = vld [vmem:[%s0 + $0x1c] sm:$0xf]
  %v23 = vld [vmem:[%s1] sm:$0xf]
  %v24 = vld [vmem:[%s1 + $0x4] sm:$0xf]
  %v25 = vld [vmem:[%s1 + $0x8] sm:$0xf]
  %v26 = vld [vmem:[%s1 + $0xc] sm:$0xf]
  %v27 = vld [vmem:[%s1 + $0x10] sm:$0xf]
  %v28 = vld [vmem:[%s1 + $0x14] sm:$0xf]
  %v29 = vld [vmem:[%s1 + $0x18] sm:$0x7]
  %v30 = vld [vmem:[%s2] sm:$0x1]
  %v32 = vlaneseq
  %v33 = vshrl.u32 %v32, 7
  %v34 = vsub.s32 0, %v33
  %v35 = vrot.slane %v30, %v34
  %v45 = vunpack.c.l.b16 %v15
  %v46 = vunpack.c.l.b16 %v16
  %v47 = vunpack.c.l.b16 %v17
  %v48 = vunpack.c.l.b16 %v18
  %v49 = vunpack.c.l.b16 %v19
  %v50 = vunpack.c.l.b16 %v20
  %v51 = vunpack.c.l.b16 %v21
  %v52 = vunpack.c.l.b16 %v22
  %v53 = vpack.c.b16 %v46, %v45
  %v54 = vpack.c.b16 %v48, %v47
  %v55 = vpack.c.b16 %v50, %v49
  %v56 = vpack.c.b16 %v52, %v51
  %v64 = vunpack.c.l.b16 %v23
  %v65 = vunpack.c.l.b16 %v24
  %v66 = vunpack.c.l.b16 %v25
  %v67 = vunpack.c.l.b16 %v26
  %v68 = vunpack.c.l.b16 %v27
  %v69 = vunpack.c.l.b16 %v28
  %v70 = vunpack.c.l.b16 %v29
  %v71 = vpack.c.b16 %v65, %v64
  %v72 = vpack.c.b16 %v67, %v66
  %v73 = vpack.c.b16 %v69, %v68
  %v74 = vpack.c.b16 %v70, %v70
  %vm78 = vcmask 441344
  %v80 = vsel %vm78, %v53, 0
  %v83 = vsel %vm78, %v54, 0
  %v86 = vsel %vm78, %v55, 0
  %v89 = vsel %vm78, %v56, 0
  %vm91 = vcmask 1042432
  %v93 = vsel %vm91, %v74, 0
  %95 = vmatprep.subr.bf16.mxu0 0
  %96 = vmatpush1.bf16.msra.mxu0 %v71
  %97 = vmatprep.subr.bf16.mxu0 0
  %98 = vmatpush1.bf16.msra.mxu0 %v72
  %99 = vmatprep.subr.bf16.mxu0 0
  %100 = vmatpush1.bf16.msra.mxu0 %v73
  %101 = vmatprep.subr.bf16.mxu0 0
  %102 = vmatpush1.bf16.msra.mxu0 %v93
  %103 = vmatprep.subr.bf16.mxu0 0
  %104 = vmatpush1.bf16.msra.mxu0 0
  %105 = vmatprep.subr.bf16.mxu0 0
  %106 = vmatpush1.bf16.msra.mxu0 0
  %107 = vmatprep.subr.bf16.mxu0 0
  %108 = vmatpush1.bf16.msra.mxu0 0
  %109 = vmatprep.subr.bf16.mxu0 0
  %110 = vmatpush1.bf16.msra.mxu0 0
  %111 = vmatprep.subr.bf16.mxu0 0
  %112 = vmatpush1.bf16.msra.mxu0 0
  %113 = vmatprep.subr.bf16.mxu0 0
  %114 = vmatpush1.bf16.msra.mxu0 0
  %115 = vmatprep.subr.bf16.mxu0 0
  %116 = vmatpush1.bf16.msra.mxu0 0
  %117 = vmatprep.subr.bf16.mxu0 0
  %118 = vmatpush1.bf16.msra.mxu0 0
  %119 = vmatprep.subr.bf16.mxu0 0
  %120 = vmatpush1.bf16.msra.mxu0 0
  %121 = vmatprep.subr.bf16.mxu0 0
  %122 = vmatpush1.bf16.msra.mxu0 0
  %123 = vmatprep.subr.bf16.mxu0 0
  %124 = vmatpush1.bf16.msra.mxu0 0
  %125 = vmatprep.subr.bf16.mxu0 0
  %126 = vmatpush1.bf16.msra.mxu0 0
  %127 = vmatprep.mubr.bf16.mxu0 0
  %128 = vmatmul.mubr.bf16.gmra.mrb[0].mxu0 %v80
  %v129 = vpop.f32.mrb[0].mxu0
  %v130 = vadd.f32 %v35, %v129
  %v131 = vpop.f32.mrb[0].mxu0
  %v132 = vpop.f32.mrb[0].mxu0
  %v133 = vadd.f32 %v35, %v132
  %v134 = vpop.f32.mrb[0].mxu0
  %135 = vmatprep.mubr.bf16.mxu0 0
  %136 = vmatmul.mubr.bf16.gmra.mrb[0].mxu0 %v83
  %v137 = vpop.f32.mrb[0].mxu0
  %v138 = vadd.f32 %v35, %v137
  %v139 = vpop.f32.mrb[0].mxu0
  %v140 = vpop.f32.mrb[0].mxu0
  %v141 = vadd.f32 %v35, %v140
  %v142 = vpop.f32.mrb[0].mxu0
  %143 = vmatprep.mubr.bf16.mxu0 0
  %144 = vmatmul.mubr.bf16.gmra.mrb[0].mxu0 %v86
  %v145 = vpop.f32.mrb[0].mxu0
  %v146 = vadd.f32 %v35, %v145
  %v147 = vpop.f32.mrb[0].mxu0
  %v148 = vpop.f32.mrb[0].mxu0
  %v149 = vadd.f32 %v35, %v148
  %v150 = vpop.f32.mrb[0].mxu0
  %151 = vmatprep.mubr.bf16.mxu0 0
  %152 = vmatmul.mubr.bf16.gmra.mrb[0].mxu0 %v89
  %v153 = vpop.f32.mrb[0].mxu0
  %v154 = vadd.f32 %v35, %v153
  %v155 = vpop.f32.mrb[0].mxu0
  %v156 = vpop.f32.mrb[0].mxu0
  %v157 = vadd.f32 %v35, %v156
  %v158 = vpop.f32.mrb[0].mxu0
  %159 = vdwg.mxu0
  %v160 = vmax.f32 %v130, 0.0
  %v161 = vmax.f32 %v133, 0.0
  %v162 = vmax.f32 %v138, 0.0
  %v163 = vmax.f32 %v141, 0.0
  %v164 = vmax.f32 %v146, 0.0
  %v165 = vmax.f32 %v149, 0.0
  %v166 = vmax.f32 %v154, 0.0
  %v167 = vmax.f32 %v157, 0.0
  %v168 = vpack.c.bf16 %v161, %v160
  %v169 = vpack.c.bf16 %v163, %v162
  %v170 = vpack.c.bf16 %v165, %v164
  %v171 = vpack.c.bf16 %v167, %v166
  %v176 = vunpack.c.l.b16 %v168
  %v177 = vunpack.c.h.b16 %v168
  %v178 = vunpack.c.l.b16 %v169
  %v179 = vunpack.c.h.b16 %v169
  %v180 = vunpack.c.l.b16 %v170
  %v181 = vunpack.c.h.b16 %v170
  %v182 = vunpack.c.l.b16 %v171
  %v183 = vunpack.c.h.b16 %v171
  %v184 = vpack.c.b16 %v176, %v176
  %v185 = vpack.c.b16 %v177, %v177
  %v186 = vpack.c.b16 %v178, %v178
  %v187 = vpack.c.b16 %v179, %v179
  %v188 = vpack.c.b16 %v180, %v180
  %v189 = vpack.c.b16 %v181, %v181
  %v190 = vpack.c.b16 %v182, %v182
  %v191 = vpack.c.b16 %v183, %v183
  %200 = vst [vmem:[%s3] sm:$0xf] %v184
  %201 = vst [vmem:[%s3 + $0x4] sm:$0xf] %v185
  %202 = vst [vmem:[%s3 + $0x8] sm:$0xf] %v186
  %203 = vst [vmem:[%s3 + $0xc] sm:$0xf] %v187
  %204 = vst [vmem:[%s3 + $0x10] sm:$0xf] %v188
  %205 = vst [vmem:[%s3 + $0x14] sm:$0xf] %v189
  %206 = vst [vmem:[%s3 + $0x18] sm:$0xf] %v190
  %207 = vst [vmem:[%s3 + $0x1c] sm:$0xf] %v191
  // Predicated region
  $region14: #{detail_branch_forward.8} parent=0 // pred_check
    _
  $region15: #{detail_branch_forward.8} parent=0 // pred_check_branch
    %209 = sbr.rel (0) target = $region17
  $region16: #{detail_branch_forward.8} parent=0 // pred_region
    _
  $region17: #{detail_branch_forward.8} parent=0 // pred_fallthru
    _
  // Predicated region
  $region18: #{detail_branch_forward.8} parent=0 // pred_check
    _
  $region19: #{detail_branch_forward.8} parent=0 // pred_check_branch
    %211 = sbr.rel (0) target = $region21
  $region20: #{detail_branch_forward.8} parent=0 // pred_region
    _
  $region21: #{detail_branch_forward.8} parent=0 // pred_fallthru
    _

// kernel: detail_branch_forward.9
$region0: #{detail_branch_forward.9}
  #allocation0 [shape = 'u32[]', space=smem, size = 0x4, offset = 0x4, fixed_abs, tag = 'smem constant byte address 0x4 - core index']
  #allocation1 [shape = 'u32[144,128]{1,0:T(1,128)}', space=vmem, size = 0x12000, scoped, tag = 'internal scratch']
  %s0 = inlined_call_operand.vmem [shape: bf16[64,1152], index: 0, kind: input, shape index: {}]
  %s1 = inlined_call_operand.vmem [shape: bf16[1152,128], index: 1, kind: input, shape index: {}]
  %s2 = inlined_call_operand.vmem [shape: f32[1,128], index: 2, kind: input, shape index: {}]
  %s3 = inlined_call_operand.vmem [shape: bf16[64,128], index: 3, kind: output, shape index: {}]
  %s4 = sld [smem:[#allocation0]]
  $region22: #{detail_branch_forward.9} parent=0
    _
  %s6 = ssub.s32 1, %s4
  %s7 = scalar_select 0, %s6, %s4
  // Predicated region
  $region2: #{detail_branch_forward.9} parent=0 // pred_check
    _
  $region3: #{detail_branch_forward.9} parent=0 // pred_check_branch
    %9 = sbr.rel (0) target = $region5
  $region4: #{detail_branch_forward.9} parent=0 // pred_region
    _
  $region5: #{detail_branch_forward.9} parent=0 // pred_fallthru
    _
  // Predicated region
  $region6: #{detail_branch_forward.9} parent=0 // pred_check
    _
  $region7: #{detail_branch_forward.9} parent=0 // pred_check_branch
    %11 = sbr.rel (0) target = $region9
  $region8: #{detail_branch_forward.9} parent=0 // pred_region
    _
  $region9: #{detail_branch_forward.9} parent=0 // pred_fallthru
    _
  // Predicated region
  $region10: #{detail_branch_forward.9} parent=0 // pred_check
    _
  $region11: #{detail_branch_forward.9} parent=0 // pred_check_branch
    %13 = sbr.rel (0) target = $region13
  $region12: #{detail_branch_forward.9} parent=0 // pred_region
    _
  $region13: #{detail_branch_forward.9} parent=0 // pred_fallthru
    _
  %v15 = vld [vmem:[%s0] sm:$0xff]
  %v16 = vld [vmem:[%s0 + $0x8] sm:$0xff]
  %v17 = vld [vmem:[%s0 + $0x10] sm:$0xff]
  %v18 = vld [vmem:[%s0 + $0x18] sm:$0xff]
  %v19 = vld [vmem:[%s0 + $0x20] sm:$0xf]
  %v20 = vld [vmem:[%s0 + $0x24] sm:$0xff]
  %v21 = vld [vmem:[%s0 + $0x2c] sm:$0xff]
  %v22 = vld [vmem:[%s0 + $0x34] sm:$0xff]
  %v23 = vld [vmem:[%s0 + $0x3c] sm:$0xff]
  %v24 = vld [vmem:[%s0 + $0x44] sm:$0xf]
  %v25 = vld [vmem:[%s0 + $0x48] sm:$0xff]
  %v26 = vld [vmem:[%s0 + $0x50] sm:$0xff]
  %v27 = vld [vmem:[%s0 + $0x58] sm:$0xff]
  %v28 = vld [vmem:[%s0 + $0x60] sm:$0xff]
  %v29 = vld [vmem:[%s0 + $0x68] sm:$0xf]
  %v30 = vld [vmem:[%s0 + $0x6c] sm:$0xff]
  %v31 = vld [vmem:[%s0 + $0x74] sm:$0xff]
  %v32 = vld [vmem:[%s0 + $0x7c] sm:$0xff]
  %v33 = vld [vmem:[%s0 + $0x84] sm:$0xff]
  %v34 = vld [vmem:[%s0 + $0x8c] sm:$0xf]
  %v35 = vld [vmem:[%s0 + $0x90] sm:$0xff]
  %v36 = vld [vmem:[%s0 + $0x98] sm:$0xff]
  %v37 = vld [vmem:[%s0 + $0xa0] sm:$0xff]
  %v38 = vld [vmem:[%s0 + $0xa8] sm:$0xff]
  %v39 = vld [vmem:[%s0 + $0xb0] sm:$0xf]
  %v40 = vld [vmem:[%s0 + $0xb4] sm:$0xff]
  %v41 = vld [vmem:[%s0 + $0xbc] sm:$0xff]
  %v42 = vld [vmem:[%s0 + $0xc4] sm:$0xff]
  %v43 = vld [vmem:[%s0 + $0xcc] sm:$0xff]
  %v44 = vld [vmem:[%s0 + $0xd4] sm:$0xf]
  %v45 = vld [vmem:[%s0 + $0xd8] sm:$0xff]
  %v46 = vld [vmem:[%s0 + $0xe0] sm:$0xff]
  %v47 = vld [vmem:[%s0 + $0xe8] sm:$0xff]
  %v48 = vld [vmem:[%s0 + $0xf0] sm:$0xff]
  %v49 = vld [vmem:[%s0 + $0xf8] sm:$0xf]
  %v50 = vld [vmem:[%s0 + $0xfc] sm:$0xff]
  %v51 = vld [vmem:[%s0 + $0x104] sm:$0xff]
  %v52 = vld [vmem:[%s0 + $0x10c] sm:$0xff]
  %v53 = vld [vmem:[%s0 + $0x114] sm:$0xff]
  %v54 = vld [vmem:[%s0 + $0x11c] sm:$0xf]
  %v55 = vld [vmem:[%s1] sm:$0xf]
  %v56 = vld [vmem:[%s1 + $0x4] sm:$0xf]
  %v57 = vld [vmem:[%s1 + $0x8] sm:$0xf]
  %v58 = vld [vmem:[%s1 + $0xc] sm:$0xf]
  %v59 = vld [vmem:[%s1 + $0x10] sm:$0xf]
  %v60 = vld [vmem:[%s1 + $0x14] sm:$0xf]
  %v61 = vld [vmem:[%s1 + $0x18] sm:$0xf]
  %v62 = vld [vmem:[%s1 + $0x1c] sm:$0xf]
  %v63 = vld [vmem:[%s1 + $0x20] sm:$0xf]
  %v64 = vld [vmem:[%s1 + $0x24] sm:$0xf]
  %v65 = vld [vmem:[%s1 + $0x28] sm:$0xf]
  %v66 = vld [vmem:[%s1 + $0x2c] sm:$0xf]
  %v67 = vld [vmem:[%s1 + $0x30] sm:$0xf]
  %v68 = vld [vmem:[%s1 + $0x34] sm:$0xf]
  %v69 = vld [vmem:[%s1 + $0x38] sm:$0xf]
  %v70 = vld [vmem:[%s1 + $0x3c] sm:$0xf]
  %v71 = vld [vmem:[%s1 + $0x40] sm:$0xf]
  %v72 = vld [vmem:[%s1 + $0x44] sm:$0xf]
  %v73 = vld [vmem:[%s1 + $0x48] sm:$0xf]
  %v74 = vld [vmem:[%s1 + $0x4c] sm:$0xf]
  %v75 = vld [vmem:[%s1 + $0x50] sm:$0xf]
  %v76 = vld [vmem:[%s1 + $0x54] sm:$0xf]
  %v77 = vld [vmem:[%s1 + $0x58] sm:$0xf]
  %v78 = vld [vmem:[%s1 + $0x5c] sm:$0xf]
  %v79 = vld [vmem:[%s1 + $0x60] sm:$0xf]
  %v80 = vld [vmem:[%s1 + $0x64] sm:$0xf]
  %v81 = vld [vmem:[%s1 + $0x68] sm:$0xf]
  %v82 = vld [vmem:[%s1 + $0x6c] sm:$0xf]
  %v83 = vld [vmem:[%s1 + $0x70] sm:$0xf]
  %v84 = vld [vmem:[%s1 + $0x74] sm:$0xf]
  %v85 = vld [vmem:[%s1 + $0x78] sm:$0xf]
  %v86 = vld [vmem:[%s1 + $0x7c] sm:$0xf]
  %v87 = vld [vmem:[%s1 + $0x80] sm:$0xf]
  %v88 = vld [vmem:[%s1 + $0x84] sm:$0xf]
  %v89 = vld [vmem:[%s1 + $0x88] sm:$0xf]
  %v90 = vld [vmem:[%s1 + $0x8c] sm:$0xf]
  %v91 = vld [vmem:[%s1 + $0x90] sm:$0xf]
  %v92 = vld [vmem:[%s1 + $0x94] sm:$0xf]
  %v93 = vld [vmem:[%s1 + $0x98] sm:$0xf]
  %v94 = vld [vmem:[%s1 + $0x9c] sm:$0xf]
  %v95 = vld [vmem:[%s1 + $0xa0] sm:$0xf]
  %v96 = vld [vmem:[%s1 + $0xa4] sm:$0xf]
  %v97 = vld [vmem:[%s1 + $0xa8] sm:$0xf]
  %v98 = vld [vmem:[%s1 + $0xac] sm:$0xf]
  %v99 = vld [vmem:[%s1 + $0xb0] sm:$0xf]
  %v100 = vld [vmem:[%s1 + $0xb4] sm:$0xf]
  %v101 = vld [vmem:[%s1 + $0xb8] sm:$0xf]
  %v102 = vld [vmem:[%s1 + $0xbc] sm:$0xf]
  %v103 = vld [vmem:[%s1 + $0xc0] sm:$0xf]
  %v104 = vld [vmem:[%s1 + $0xc4] sm:$0xf]
  %v105 = vld [vmem:[%s1 + $0xc8] sm:$0xf]
  %v106 = vld [vmem:[%s1 + $0xcc] sm:$0xf]
  %v107 = vld [vmem:[%s1 + $0xd0] sm:$0xf]
  %v108 = vld [vmem:[%s1 + $0xd4] sm:$0xf]
  %v109 = vld [vmem:[%s1 + $0xd8] sm:$0xf]
  %v110 = vld [vmem:[%s1 + $0xdc] sm:$0xf]
  %v111 = vld [vmem:[%s1 + $0xe0] sm:$0xf]
  %v112 = vld [vmem:[%s1 + $0xe4] sm:$0xf]
  %v113 = vld [vmem:[%s1 + $0xe8] sm:$0xf]
  %v114 = vld [vmem:[%s1 + $0xec] sm:$0xf]
  %v115 = vld [vmem:[%s1 + $0xf0] sm:$0xf]
  %v116 = vld [vmem:[%s1 + $0xf4] sm:$0xf]
  %v117 = vld [vmem:[%s1 + $0xf8] sm:$0xf]
  %v118 = vld [vmem:[%s1 + $0xfc] sm:$0xf]
  %v119 = vld [vmem:[%s1 + $0x100] sm:$0xf]
  %v120 = vld [vmem:[%s1 + $0x104] sm:$0xf]
  %v121 = vld [vmem:[%s1 + $0x108] sm:$0xf]
  %v122 = vld [vmem:[%s1 + $0x10c] sm:$0xf]
  %v123 = vld [vmem:[%s1 + $0x110] sm:$0xf]
  %v124 = vld [vmem:[%s1 + $0x114] sm:$0xf]
  %v125 = vld [vmem:[%s1 + $0x118] sm:$0xf]
  %v126 = vld [vmem:[%s1 + $0x11c] sm:$0xf]
  %v127 = vld [vmem:[%s1 + $0x120] sm:$0xf]
  %v128 = vld [vmem:[%s1 + $0x124] sm:$0xf]
  %v129 = vld [vmem:[%s1 + $0x128] sm:$0xf]
  %v130 = vld [vmem:[%s1 + $0x12c] sm:$0xf]
  %v131 = vld [vmem:[%s1 + $0x130] sm:$0xf]
  %v132 = vld [vmem:[%s1 + $0x134] sm:$0xf]
  %v133 = vld [vmem:[%s1 + $0x138] sm:$0xf]
  %v134 = vld [vmem:[%s1 + $0x13c] sm:$0xf]
  %v135 = vld [vmem:[%s1 + $0x140] sm:$0xf]
  %v136 = vld [vmem:[%s1 + $0x144] sm:$0xf]
  %v137 = vld [vmem:[%s1 + $0x148] sm:$0xf]
  %v138 = vld [vmem:[%s1 + $0x14c] sm:$0xf]
  %v139 = vld [vmem:[%s1 + $0x150] sm:$0xf]
  %v140 = vld [vmem:[%s1 + $0x154] sm:$0xf]
  %v141 = vld [vmem:[%s1 + $0x158] sm:$0xf]
  %v142 = vld [vmem:[%s1 + $0x15c] sm:$0xf]
  %v143 = vld [vmem:[%s1 + $0x160] sm:$0xf]
  %v144 = vld [vmem:[%s1 + $0x164] sm:$0xf]
  %v145 = vld [vmem:[%s1 + $0x168] sm:$0xf]
  %v146 = vld [vmem:[%s1 + $0x16c] sm:$0xf]
  %v147 = vld [vmem:[%s1 + $0x170] sm:$0xf]
  %v148 = vld [vmem:[%s1 + $0x174] sm:$0xf]
  %v149 = vld [vmem:[%s1 + $0x178] sm:$0xf]
  %v150 = vld [vmem:[%s1 + $0x17c] sm:$0xf]
  %v151 = vld [vmem:[%s1 + $0x180] sm:$0xf]
  %v152 = vld [vmem:[%s1 + $0x184] sm:$0xf]
  %v153 = vld [vmem:[%s1 + $0x188] sm:$0xf]
  %v154 = vld [vmem:[%s1 + $0x18c] sm:$0xf]
  %v155 = vld [vmem:[%s1 + $0x190] sm:$0xf]
  %v156 = vld [vmem:[%s1 + $0x194] sm:$0xf]
  %v157 = vld [vmem:[%s1 + $0x198] sm:$0xf]
  %v158 = vld [vmem:[%s1 + $0x19c] sm:$0xf]
  %v159 = vld [vmem:[%s1 + $0x1a0] sm:$0xf]
  %v160 = vld [vmem:[%s1 + $0x1a4] sm:$0xf]
  %v161 = vld [vmem:[%s1 + $0x1a8] sm:$0xf]
  %v162 = vld [vmem:[%s1 + $0x1ac] sm:$0xf]
  %v163 = vld [vmem:[%s1 + $0x1b0] sm:$0xf]
  %v164 = vld [vmem:[%s1 + $0x1b4] sm:$0xf]
  %v165 = vld [vmem:[%s1 + $0x1b8] sm:$0xf]
  %v166 = vld [vmem:[%s1 + $0x1bc] sm:$0xf]
  %v167 = vld [vmem:[%s1 + $0x1c0] sm:$0xf]
  %v168 = vld [vmem:[%s1 + $0x1c4] sm:$0xf]
  %v169 = vld [vmem:[%s1 + $0x1c8] sm:$0xf]
  %v170 = vld [vmem:[%s1 + $0x1cc] sm:$0xf]
  %v171 = vld [vmem:[%s1 + $0x1d0] sm:$0xf]
  %v172 = vld [vmem:[%s1 + $0x1d4] sm:$0xf]
  %v173 = vld [vmem:[%s1 + $0x1d8] sm:$0xf]
  %v174 = vld [vmem:[%s1 + $0x1dc] sm:$0xf]
  %v175 = vld [vmem:[%s1 + $0x1e0] sm:$0xf]
  %v176 = vld [vmem:[%s1 + $0x1e4] sm:$0xf]
  %v177 = vld [vmem:[%s1 + $0x1e8] sm:$0xf]
  %v178 = vld [vmem:[%s1 + $0x1ec] sm:$0xf]
  %v179 = vld [vmem:[%s1 + $0x1f0] sm:$0xf]
  %v180 = vld [vmem:[%s1 + $0x1f4] sm:$0xf]
  %v181 = vld [vmem:[%s1 + $0x1f8] sm:$0xf]
  %v182 = vld [vmem:[%s1 + $0x1fc] sm:$0xf]
  %v183 = vld [vmem:[%s1 + $0x200] sm:$0xf]
  %v184 = vld [vmem:[%s1 + $0x204] sm:$0xf]
  %v185 = vld [vmem:[%s1 + $0x208] sm:$0xf]
  %v186 = vld [vmem:[%s1 + $0x20c] sm:$0xf]
  %v187 = vld [vmem:[%s1 + $0x210] sm:$0xf]
  %v188 = vld [vmem:[%s1 + $0x214] sm:$0xf]
  %v189 = vld [vmem:[%s1 + $0x218] sm:$0xf]
  %v190 = vld [vmem:[%s1 + $0x21c] sm:$0xf]
  %v191 = vld [vmem:[%s1 + $0x220] sm:$0xf]
  %v192 = vld [vmem:[%s1 + $0x224] sm:$0xf]
  %v193 = vld [vmem:[%s1 + $0x228] sm:$0xf]
  %v194 = vld [vmem:[%s1 + $0x22c] sm:$0xf]
  %v195 = vld [vmem:[%s1 + $0x230] sm:$0xf]
  %v196 = vld [vmem:[%s1 + $0x234] sm:$0xf]
  %v197 = vld [vmem:[%s1 + $0x238] sm:$0xf]
  %v198 = vld [vmem:[%s1 + $0x23c] sm:$0xf]
  %v199 = vld [vmem:[%s2] sm:$0x1]
  %v201 = vlaneseq
  %v202 = vshrl.u32 %v201, 7
  %v203 = vsub.s32 0, %v202
  %v204 = vrot.slane %v199, %v203
  %v246 = vunpack.c.l.b16 %v15
  %v247 = vunpack.c.h.b16 %v15
  %v248 = vunpack.c.l.b16 %v16
  %v249 = vunpack.c.h.b16 %v16
  %v250 = vunpack.c.l.b16 %v17
  %v251 = vunpack.c.h.b16 %v17
  %v252 = vunpack.c.l.b16 %v18
  %v253 = vunpack.c.h.b16 %v18
  %v254 = vunpack.c.l.b16 %v19
  %v255 = vunpack.c.l.b16 %v20
  %v256 = vunpack.c.h.b16 %v20
  %v257 = vunpack.c.l.b16 %v21
  %v258 = vunpack.c.h.b16 %v21
  %v259 = vunpack.c.l.b16 %v22
  %v260 = vunpack.c.h.b16 %v22
  %v261 = vunpack.c.l.b16 %v23
  %v262 = vunpack.c.h.b16 %v23
  %v263 = vunpack.c.l.b16 %v24
  %v264 = vunpack.c.l.b16 %v25
  %v265 = vunpack.c.h.b16 %v25
  %v266 = vunpack.c.l.b16 %v26
  %v267 = vunpack.c.h.b16 %v26
  %v268 = vunpack.c.l.b16 %v27
  %v269 = vunpack.c.h.b16 %v27
  %v270 = vunpack.c.l.b16 %v28
  %v271 = vunpack.c.h.b16 %v28
  %v272 = vunpack.c.l.b16 %v29
  %v273 = vunpack.c.l.b16 %v30
  %v274 = vunpack.c.h.b16 %v30
  %v275 = vunpack.c.l.b16 %v31
  %v276 = vunpack.c.h.b16 %v31
  %v277 = vunpack.c.l.b16 %v32
  %v278 = vunpack.c.h.b16 %v32
  %v279 = vunpack.c.l.b16 %v33
  %v280 = vunpack.c.h.b16 %v33
  %v281 = vunpack.c.l.b16 %v34
  %v282 = vunpack.c.l.b16 %v35
  %v283 = vunpack.c.h.b16 %v35
  %v284 = vunpack.c.l.b16 %v36
  %v285 = vunpack.c.h.b16 %v36
  %v286 = vunpack.c.l.b16 %v37
  %v287 = vunpack.c.h.b16 %v37
  %v288 = vunpack.c.l.b16 %v38
  %v289 = vunpack.c.h.b16 %v38
  %v290 = vunpack.c.l.b16 %v39
  %v291 = vunpack.c.l.b16 %v40
  %v292 = vunpack.c.h.b16 %v40
  %v293 = vunpack.c.l.b16 %v41
  %v294 = vunpack.c.h.b16 %v41
  %v295 = vunpack.c.l.b16 %v42
  %v296 = vunpack.c.h.b16 %v42
  %v297 = vunpack.c.l.b16 %v43
  %v298 = vunpack.c.h.b16 %v43
  %v299 = vunpack.c.l.b16 %v44
  %v300 = vunpack.c.l.b16 %v45
  %v301 = vunpack.c.h.b16 %v45
  %v302 = vunpack.c.l.b16 %v46
  %v303 = vunpack.c.h.b16 %v46
  %v304 = vunpack.c.l.b16 %v47
  %v305 = vunpack.c.h.b16 %v47
  %v306 = vunpack.c.l.b16 %v48
  %v307 = vunpack.c.h.b16 %v48
  %v308 = vunpack.c.l.b16 %v49
  %v309 = vunpack.c.l.b16 %v50
  %v310 = vunpack.c.h.b16 %v50
  %v311 = vunpack.c.l.b16 %v51
  %v312 = vunpack.c.h.b16 %v51
  %v313 = vunpack.c.l.b16 %v52
  %v314 = vunpack.c.h.b16 %v52
  %v315 = vunpack.c.l.b16 %v53
  %v316 = vunpack.c.h.b16 %v53
  %v317 = vunpack.c.l.b16 %v54
  %v318 = vpack.c.b16 %v255, %v246
  %v319 = vpack.c.b16 %v256, %v247
  %v320 = vpack.c.b16 %v257, %v248
  %v321 = vpack.c.b16 %v258, %v249
  %v322 = vpack.c.b16 %v259, %v250
  %v323 = vpack.c.b16 %v260, %v251
  %v324 = vpack.c.b16 %v261, %v252
  %v325 = vpack.c.b16 %v262, %v253
  %v326 = vpack.c.b16 %v263, %v254
  %v327 = vpack.c.b16 %v273, %v264
  %v328 = vpack.c.b16 %v274, %v265
  %v329 = vpack.c.b16 %v275, %v266
  %v330 = vpack.c.b16 %v276, %v267
  %v331 = vpack.c.b16 %v277, %v268
  %v332 = vpack.c.b16 %v278, %v269
  %v333 = vpack.c.b16 %v279, %v270
  %v334 = vpack.c.b16 %v280, %v271
  %v335 = vpack.c.b16 %v281, %v272
  %v336 = vpack.c.b16 %v291, %v282
  %v337 = vpack.c.b16 %v292, %v283
  %v338 = vpack.c.b16 %v293, %v284
  %v339 = vpack.c.b16 %v294, %v285
  %v340 = vpack.c.b16 %v295, %v286
  %v341 = vpack.c.b16 %v296, %v287
  %v342 = vpack.c.b16 %v297, %v288
  %v343 = vpack.c.b16 %v298, %v289
  %v344 = vpack.c.b16 %v299, %v290
  %v345 = vpack.c.b16 %v309, %v300
  %v346 = vpack.c.b16 %v310, %v301
  %v347 = vpack.c.b16 %v311, %v302
  %v348 = vpack.c.b16 %v312, %v303
  %v349 = vpack.c.b16 %v313, %v304
  %v350 = vpack.c.b16 %v314, %v305
  %v351 = vpack.c.b16 %v315, %v306
  %v352 = vpack.c.b16 %v316, %v307
  %v353 = vpack.c.b16 %v317, %v308
  %v534 = vunpack.c.l.b16 %v55
  %v535 = vunpack.c.l.b16 %v56
  %v536 = vunpack.c.l.b16 %v57
  %v537 = vunpack.c.l.b16 %v58
  %v538 = vunpack.c.l.b16 %v59
  %v539 = vunpack.c.l.b16 %v60
  %v540 = vunpack.c.l.b16 %v61
  %v541 = vunpack.c.l.b16 %v62
  %v542 = vunpack.c.l.b16 %v63
  %v543 = vunpack.c.l.b16 %v64
  %v544 = vunpack.c.l.b16 %v65
  %v545 = vunpack.c.l.b16 %v66
  %v546 = vunpack.c.l.b16 %v67
  %v547 = vunpack.c.l.b16 %v68
  %v548 = vunpack.c.l.b16 %v69
  %v549 = vunpack.c.l.b16 %v70
  %v550 = vunpack.c.l.b16 %v71
  %v551 = vunpack.c.l.b16 %v72
  %v552 = vunpack.c.l.b16 %v73
  %v553 = vunpack.c.l.b16 %v74
  %v554 = vunpack.c.l.b16 %v75
  %v555 = vunpack.c.l.b16 %v76
  %v556 = vunpack.c.l.b16 %v77
  %v557 = vunpack.c.l.b16 %v78
  %v558 = vunpack.c.l.b16 %v79
  %v559 = vunpack.c.l.b16 %v80
  %v560 = vunpack.c.l.b16 %v81
  %v561 = vunpack.c.l.b16 %v82
  %v562 = vunpack.c.l.b16 %v83
  %v563 = vunpack.c.l.b16 %v84
  %v564 = vunpack.c.l.b16 %v85
  %v565 = vunpack.c.l.b16 %v86
  %v566 = vunpack.c.l.b16 %v87
  %v567 = vunpack.c.l.b16 %v88
  %v568 = vunpack.c.l.b16 %v89
  %v569 = vunpack.c.l.b16 %v90
  %v570 = vunpack.c.l.b16 %v91
  %v571 = vunpack.c.l.b16 %v92
  %v572 = vunpack.c.l.b16 %v93
  %v573 = vunpack.c.l.b16 %v94
  %v574 = vunpack.c.l.b16 %v95
  %v575 = vunpack.c.l.b16 %v96
  %v576 = vunpack.c.l.b16 %v97
  %v577 = vunpack.c.l.b16 %v98
  %v578 = vunpack.c.l.b16 %v99
  %v579 = vunpack.c.l.b16 %v100
  %v580 = vunpack.c.l.b16 %v101
  %v581 = vunpack.c.l.b16 %v102
  %v582 = vunpack.c.l.b16 %v103
  %v583 = vunpack.c.l.b16 %v104
  %v584 = vunpack.c.l.b16 %v105
  %v585 = vunpack.c.l.b16 %v106
  %v586 = vunpack.c.l.b16 %v107
  %v587 = vunpack.c.l.b16 %v108
  %v588 = vunpack.c.l.b16 %v109
  %v589 = vunpack.c.l.b16 %v110
  %v590 = vunpack.c.l.b16 %v111
  %v591 = vunpack.c.l.b16 %v112
  %v592 = vunpack.c.l.b16 %v113
  %v593 = vunpack.c.l.b16 %v114
  %v594 = vunpack.c.l.b16 %v115
  %v595 = vunpack.c.l.b16 %v116
  %v596 = vunpack.c.l.b16 %v117
  %v597 = vunpack.c.l.b16 %v118
  %v598 = vunpack.c.l.b16 %v119
  %v599 = vunpack.c.l.b16 %v120
  %v600 = vunpack.c.l.b16 %v121
  %v601 = vunpack.c.l.b16 %v122
  %v602 = vunpack.c.l.b16 %v123
  %v603 = vunpack.c.l.b16 %v124
  %v604 = vunpack.c.l.b16 %v125
  %v605 = vunpack.c.l.b16 %v126
  %v606 = vunpack.c.l.b16 %v127
  %v607 = vunpack.c.l.b16 %v128
  %v608 = vunpack.c.l.b16 %v129
  %v609 = vunpack.c.l.b16 %v130
  %v610 = vunpack.c.l.b16 %v131
  %v611 = vunpack.c.l.b16 %v132
  %v612 = vunpack.c.l.b16 %v133
  %v613 = vunpack.c.l.b16 %v134
  %v614 = vunpack.c.l.b16 %v135
  %v615 = vunpack.c.l.b16 %v136
  %v616 = vunpack.c.l.b16 %v137
  %v617 = vunpack.c.l.b16 %v138
  %v618 = vunpack.c.l.b16 %v139
  %v619 = vunpack.c.l.b16 %v140
  %v620 = vunpack.c.l.b16 %v141
  %v621 = vunpack.c.l.b16 %v142
  %v622 = vunpack.c.l.b16 %v143
  %v623 = vunpack.c.l.b16 %v144
  %v624 = vunpack.c.l.b16 %v145
  %v625 = vunpack.c.l.b16 %v146
  %v626 = vunpack.c.l.b16 %v147
  %v627 = vunpack.c.l.b16 %v148
  %v628 = vunpack.c.l.b16 %v149
  %v629 = vunpack.c.l.b16 %v150
  %v630 = vunpack.c.l.b16 %v151
  %v631 = vunpack.c.l.b16 %v152
  %v632 = vunpack.c.l.b16 %v153
  %v633 = vunpack.c.l.b16 %v154
  %v634 = vunpack.c.l.b16 %v155
  %v635 = vunpack.c.l.b16 %v156
  %v636 = vunpack.c.l.b16 %v157
  %v637 = vunpack.c.l.b16 %v158
  %v638 = vunpack.c.l.b16 %v159
  %v639 = vunpack.c.l.b16 %v160
  %v640 = vunpack.c.l.b16 %v161
  %v641 = vunpack.c.l.b16 %v162
  %v642 = vunpack.c.l.b16 %v163
  %v643 = vunpack.c.l.b16 %v164
  %v644 = vunpack.c.l.b16 %v165
  %v645 = vunpack.c.l.b16 %v166
  %v646 = vunpack.c.l.b16 %v167
  %v647 = vunpack.c.l.b16 %v168
  %v648 = vunpack.c.l.b16 %v169
  %v649 = vunpack.c.l.b16 %v170
  %v650 = vunpack.c.l.b16 %v171
  %v651 = vunpack.c.l.b16 %v172
  %v652 = vunpack.c.l.b16 %v173
  %v653 = vunpack.c.l.b16 %v174
  %v654 = vunpack.c.l.b16 %v175
  %v655 = vunpack.c.l.b16 %v176
  %v656 = vunpack.c.l.b16 %v177
  %v657 = vunpack.c.l.b16 %v178
  %v658 = vunpack.c.l.b16 %v179
  %v659 = vunpack.c.l.b16 %v180
  %v660 = vunpack.c.l.b16 %v181
  %v661 = vunpack.c.l.b16 %v182
  %v662 = vunpack.c.l.b16 %v183
  %v663 = vunpack.c.l.b16 %v184
  %v664 = vunpack.c.l.b16 %v185
  %v665 = vunpack.c.l.b16 %v186
  %v666 = vunpack.c.l.b16 %v187
  %v667 = vunpack.c.l.b16 %v188
  %v668 = vunpack.c.l.b16 %v189
  %v669 = vunpack.c.l.b16 %v190
  %v670 = vunpack.c.l.b16 %v191
  %v671 = vunpack.c.l.b16 %v192
  %v672 = vunpack.c.l.b16 %v193
  %v673 = vunpack.c.l.b16 %v194
  %v674 = vunpack.c.l.b16 %v195
  %v675 = vunpack.c.l.b16 %v196
  %v676 = vunpack.c.l.b16 %v197
  %v677 = vunpack.c.l.b16 %v198
  %v678 = vpack.c.b16 %v535, %v534
  %v679 = vpack.c.b16 %v537, %v536
  %v680 = vpack.c.b16 %v539, %v538
  %v681 = vpack.c.b16 %v541, %v540
  %v682 = vpack.c.b16 %v543, %v542
  %v683 = vpack.c.b16 %v545, %v544
  %v684 = vpack.c.b16 %v547, %v546
  %v685 = vpack.c.b16 %v549, %v548
  %v686 = vpack.c.b16 %v551, %v550
  %v687 = vpack.c.b16 %v553, %v552
  %v688 = vpack.c.b16 %v555, %v554
  %v689 = vpack.c.b16 %v557, %v556
  %v690 = vpack.c.b16 %v559, %v558
  %v691 = vpack.c.b16 %v561, %v560
  %v692 = vpack.c.b16 %v563, %v562
  %v693 = vpack.c.b16 %v565, %v564
  %v694 = vpack.c.b16 %v567, %v566
  %v695 = vpack.c.b16 %v569, %v568
  %v696 = vpack.c.b16 %v571, %v570
  %v697 = vpack.c.b16 %v573, %v572
  %v698 = vpack.c.b16 %v575, %v574
  %v699 = vpack.c.b16 %v577, %v576
  %v700 = vpack.c.b16 %v579, %v578
  %v701 = vpack.c.b16 %v581, %v580
  %v702 = vpack.c.b16 %v583, %v582
  %v703 = vpack.c.b16 %v585, %v584
  %v704 = vpack.c.b16 %v587, %v586
  %v705 = vpack.c.b16 %v589, %v588
  %v706 = vpack.c.b16 %v591, %v590
  %v707 = vpack.c.b16 %v593, %v592
  %v708 = vpack.c.b16 %v595, %v594
  %v709 = vpack.c.b16 %v597, %v596
  %v710 = vpack.c.b16 %v599, %v598
  %v711 = vpack.c.b16 %v601, %v600
  %v712 = vpack.c.b16 %v603, %v602
  %v713 = vpack.c.b16 %v605, %v604
  %v714 = vpack.c.b16 %v607, %v606
  %v715 = vpack.c.b16 %v609, %v608
  %v716 = vpack.c.b16 %v611, %v610
  %v717 = vpack.c.b16 %v613, %v612
  %v718 = vpack.c.b16 %v615, %v614
  %v719 = vpack.c.b16 %v617, %v616
  %v720 = vpack.c.b16 %v619, %v618
  %v721 = vpack.c.b16 %v621, %v620
  %v722 = vpack.c.b16 %v623, %v622
  %v723 = vpack.c.b16 %v625, %v624
  %v724 = vpack.c.b16 %v627, %v626
  %v725 = vpack.c.b16 %v629, %v628
  %v726 = vpack.c.b16 %v631, %v630
  %v727 = vpack.c.b16 %v633, %v632
  %v728 = vpack.c.b16 %v635, %v634
  %v729 = vpack.c.b16 %v637, %v636
  %v730 = vpack.c.b16 %v639, %v638
  %v731 = vpack.c.b16 %v641, %v640
  %v732 = vpack.c.b16 %v643, %v642
  %v733 = vpack.c.b16 %v645, %v644
  %v734 = vpack.c.b16 %v647, %v646
  %v735 = vpack.c.b16 %v649, %v648
  %v736 = vpack.c.b16 %v651, %v650
  %v737 = vpack.c.b16 %v653, %v652
  %v738 = vpack.c.b16 %v655, %v654
  %v739 = vpack.c.b16 %v657, %v656
  %v740 = vpack.c.b16 %v659, %v658
  %v741 = vpack.c.b16 %v661, %v660
  %v742 = vpack.c.b16 %v663, %v662
  %v743 = vpack.c.b16 %v665, %v664
  %v744 = vpack.c.b16 %v667, %v666
  %v745 = vpack.c.b16 %v669, %v668
  %v746 = vpack.c.b16 %v671, %v670
  %v747 = vpack.c.b16 %v673, %v672
  %v748 = vpack.c.b16 %v675, %v674
  %v749 = vpack.c.b16 %v677, %v676
  %822 = vmatprep.subr.bf16.mxu0 0
  %823 = vmatpush1.bf16.msra.mxu0 %v678
  %824 = vmatprep.subr.bf16.mxu0 0
  %825 = vmatpush1.bf16.msra.mxu0 %v679
  %826 = vmatprep.subr.bf16.mxu0 0
  %827 = vmatpush1.bf16.msra.mxu0 %v680
  %828 = vmatprep.subr.bf16.mxu0 0
  %829 = vmatpush1.bf16.msra.mxu0 %v681
  %830 = vmatprep.subr.bf16.mxu0 0
  %831 = vmatpush1.bf16.msra.mxu0 %v682
  %832 = vmatprep.subr.bf16.mxu0 0
  %833 = vmatpush1.bf16.msra.mxu0 %v683
  %834 = vmatprep.subr.bf16.mxu0 0
  %835 = vmatpush1.bf16.msra.mxu0 %v684
  %836 = vmatprep.subr.bf16.mxu0 0
  %837 = vmatpush1.bf16.msra.mxu0 %v685
  %838 = vmatprep.subr.bf16.mxu0 0
  %839 = vmatpush1.bf16.msra.mxu0 %v686
  %840 = vmatprep.subr.bf16.mxu0 0
  %841 = vmatpush1.bf16.msra.mxu0 %v687
  %842 = vmatprep.subr.bf16.mxu0 0
  %843 = vmatpush1.bf16.msra.mxu0 %v688
  %844 = vmatprep.subr.bf16.mxu0 0
  %845 = vmatpush1.bf16.msra.mxu0 %v689
  %846 = vmatprep.subr.bf16.mxu0 0
  %847 = vmatpush1.bf16.msra.mxu0 %v690
  %848 = vmatprep.subr.bf16.mxu0 0
  %849 = vmatpush1.bf16.msra.mxu0 %v691
  %850 = vmatprep.subr.bf16.mxu0 0
  %851 = vmatpush1.bf16.msra.mxu0 %v692
  %852 = vmatprep.subr.bf16.mxu0 0
  %853 = vmatpush1.bf16.msra.mxu0 %v693
  %854 = vmatprep.mubr.bf16.mxu0 %v319
  %855 = vmatmul.mubr.bf16.gmra.mrb[0].mxu0 %v318
  %v856 = vpop.f32.mrb[0].mxu0
  %v857 = vadd.f32 %v204, %v856
  %v858 = vpop.f32.mrb[0].mxu0
  %v859 = vpop.f32.mrb[0].mxu0
  %v860 = vadd.f32 %v204, %v859
  %v861 = vpop.f32.mrb[0].mxu0
  %862 = vmatprep.mubr.bf16.mxu0 %v328
  %863 = vmatmul.mubr.bf16.gmra.mrb[0].mxu0 %v327
  %v864 = vpop.f32.mrb[0].mxu0
  %v865 = vadd.f32 %v204, %v864
  %v866 = vpop.f32.mrb[0].mxu0
  %v867 = vpop.f32.mrb[0].mxu0
  %v868 = vadd.f32 %v204, %v867
  %v869 = vpop.f32.mrb[0].mxu0
  %870 = vmatprep.mubr.bf16.mxu0 %v337
  %871 = vmatmul.mubr.bf16.gmra.mrb[0].mxu0 %v336
  %v872 = vpop.f32.mrb[0].mxu0
  %v873 = vadd.f32 %v204, %v872
  %v874 = vpop.f32.mrb[0].mxu0
  %v875 = vpop.f32.mrb[0].mxu0
  %v876 = vadd.f32 %v204, %v875
  %v877 = vpop.f32.mrb[0].mxu0
  %878 = vmatprep.mubr.bf16.mxu0 %v346
  %879 = vmatmul.mubr.bf16.gmra.mrb[0].mxu0 %v345
  %v880 = vpop.f32.mrb[0].mxu0
  %v881 = vadd.f32 %v204, %v880
  %v882 = vpop.f32.mrb[0].mxu0
  %v883 = vpop.f32.mrb[0].mxu0
  %v884 = vadd.f32 %v204, %v883
  %v885 = vpop.f32.mrb[0].mxu0
  %886 = vdwg.mxu0
  %887 = vmatprep.subr.bf16.mxu0 0
  %888 = vmatpush1.bf16.msra.mxu0 %v694
  %889 = vmatprep.subr.bf16.mxu0 0
  %890 = vmatpush1.bf16.msra.mxu0 %v695
  %891 = vmatprep.subr.bf16.mxu0 0
  %892 = vmatpush1.bf16.msra.mxu0 %v696
  %893 = vmatprep.subr.bf16.mxu0 0
  %894 = vmatpush1.bf16.msra.mxu0 %v697
  %895 = vmatprep.subr.bf16.mxu0 0
  %896 = vmatpush1.bf16.msra.mxu0 %v698
  %897 = vmatprep.subr.bf16.mxu0 0
  %898 = vmatpush1.bf16.msra.mxu0 %v699
  %899 = vmatprep.subr.bf16.mxu0 0
  %900 = vmatpush1.bf16.msra.mxu0 %v700
  %901 = vmatprep.subr.bf16.mxu0 0
  %902 = vmatpush1.bf16.msra.mxu0 %v701
  %903 = vmatprep.subr.bf16.mxu0 0
  %904 = vmatpush1.bf16.msra.mxu0 %v702
  %905 = vmatprep.subr.bf16.mxu0 0
  %906 = vmatpush1.bf16.msra.mxu0 %v703
  %907 = vmatprep.subr.bf16.mxu0 0
  %908 = vmatpush1.bf16.msra.mxu0 %v704
  %909 = vmatprep.subr.bf16.mxu0 0
  %910 = vmatpush1.bf16.msra.mxu0 %v705
  %911 = vmatprep.subr.bf16.mxu0 0
  %912 = vmatpush1.bf16.msra.mxu0 %v706
  %913 = vmatprep.subr.bf16.mxu0 0
  %914 = vmatpush1.bf16.msra.mxu0 %v707
  %915 = vmatprep.subr.bf16.mxu0 0
  %916 = vmatpush1.bf16.msra.mxu0 %v708
  %917 = vmatprep.subr.bf16.mxu0 0
  %918 = vmatpush1.bf16.msra.mxu0 %v709
  %919 = vmatprep.mubr.bf16.mxu0 %v321
  %920 = vmatmul.mubr.bf16.gmra.mrb[0].mxu0 %v320
  %v921 = vpop.f32.mrb[0].mxu0
  %v922 = vadd.f32 %v857, %v921
  %v923 = vpop.f32.mrb[0].mxu0
  %v924 = vpop.f32.mrb[0].mxu0
  %v925 = vadd.f32 %v860, %v924
  %v926 = vpop.f32.mrb[0].mxu0
  %927 = vmatprep.mubr.bf16.mxu0 %v330
  %928 = vmatmul.mubr.bf16.gmra.mrb[0].mxu0 %v329
  %v929 = vpop.f32.mrb[0].mxu0
  %v930 = vadd.f32 %v865, %v929
  %v931 = vpop.f32.mrb[0].mxu0
  %v932 = vpop.f32.mrb[0].mxu0
  %v933 = vadd.f32 %v868, %v932
  %v934 = vpop.f32.mrb[0].mxu0
  %935 = vmatprep.mubr.bf16.mxu0 %v339
  %936 = vmatmul.mubr.bf16.gmra.mrb[0].mxu0 %v338
  %v937 = vpop.f32.mrb[0].mxu0
  %v938 = vadd.f32 %v873, %v937
  %v939 = vpop.f32.mrb[0].mxu0
  %v940 = vpop.f32.mrb[0].mxu0
  %v941 = vadd.f32 %v876, %v940
  %v942 = vpop.f32.mrb[0].mxu0
  %943 = vmatprep.mubr.bf16.mxu0 %v348
  %944 = vmatmul.mubr.bf16.gmra.mrb[0].mxu0 %v347
  %v945 = vpop.f32.mrb[0].mxu0
  %v946 = vadd.f32 %v881, %v945
  %v947 = vpop.f32.mrb[0].mxu0
  %v948 = vpop.f32.mrb[0].mxu0
  %v949 = vadd.f32 %v884, %v948
  %v950 = vpop.f32.mrb[0].mxu0
  %951 = vdwg.mxu0
  %952 = vmatprep.subr.bf16.mxu0 0
  %953 = vmatpush1.bf16.msra.mxu0 %v710
  %954 = vmatprep.subr.bf16.mxu0 0
  %955 = vmatpush1.bf16.msra.mxu0 %v711
  %956 = vmatprep.subr.bf16.mxu0 0
  %957 = vmatpush1.bf16.msra.mxu0 %v712
  %958 = vmatprep.subr.bf16.mxu0 0
  %959 = vmatpush1.bf16.msra.mxu0 %v713
  %960 = vmatprep.subr.bf16.mxu0 0
  %961 = vmatpush1.bf16.msra.mxu0 %v714
  %962 = vmatprep.subr.bf16.mxu0 0
  %963 = vmatpush1.bf16.msra.mxu0 %v715
  %964 = vmatprep.subr.bf16.mxu0 0
  %965 = vmatpush1.bf16.msra.mxu0 %v716
  %966 = vmatprep.subr.bf16.mxu0 0
  %967 = vmatpush1.bf16.msra.mxu0 %v717
  %968 = vmatprep.subr.bf16.mxu0 0
  %969 = vmatpush1.bf16.msra.mxu0 %v718
  %970 = vmatprep.subr.bf16.mxu0 0
  %971 = vmatpush1.bf16.msra.mxu0 %v719
  %972 = vmatprep.subr.bf16.mxu0 0
  %973 = vmatpush1.bf16.msra.mxu0 %v720
  %974 = vmatprep.subr.bf16.mxu0 0
  %975 = vmatpush1.bf16.msra.mxu0 %v721
  %976 = vmatprep.subr.bf16.mxu0 0
  %977 = vmatpush1.bf16.msra.mxu0 %v722
  %978 = vmatprep.subr.bf16.mxu0 0
  %979 = vmatpush1.bf16.msra.mxu0 %v723
  %980 = vmatprep.subr.bf16.mxu0 0
  %981 = vmatpush1.bf16.msra.mxu0 %v724
  %982 = vmatprep.subr.bf16.mxu0 0
  %983 = vmatpush1.bf16.msra.mxu0 %v725
  %984 = vmatprep.mubr.bf16.mxu0 %v323
  %985 = vmatmul.mubr.bf16.gmra.mrb[0].mxu0 %v322
  %v986 = vpop.f32.mrb[0].mxu0
  %v987 = vadd.f32 %v922, %v986
  %v988 = vpop.f32.mrb[0].mxu0
  %v989 = vpop.f32.mrb[0].mxu0
  %v990 = vadd.f32 %v925, %v989
  %v991 = vpop.f32.mrb[0].mxu0
  %992 = vmatprep.mubr.bf16.mxu0 %v332
  %993 = vmatmul.mubr.bf16.gmra.mrb[0].mxu0 %v331
  %v994 = vpop.f32.mrb[0].mxu0
  %v995 = vadd.f32 %v930, %v994
  %v996 = vpop.f32.mrb[0].mxu0
  %v997 = vpop.f32.mrb[0].mxu0
  %v998 = vadd.f32 %v933, %v997
  %v999 = vpop.f32.mrb[0].mxu0
  %1000 = vmatprep.mubr.bf16.mxu0 %v341
  %1001 = vmatmul.mubr.bf16.gmra.mrb[0].mxu0 %v340
  %v1002 = vpop.f32.mrb[0].mxu0
  %v1003 = vadd.f32 %v938, %v1002
  %v1004 = vpop.f32.mrb[0].mxu0
  %v1005 = vpop.f32.mrb[0].mxu0
  %v1006 = vadd.f32 %v941, %v1005
  %v1007 = vpop.f32.mrb[0].mxu0
  %1008 = vmatprep.mubr.bf16.mxu0 %v350
  %1009 = vmatmul.mubr.bf16.gmra.mrb[0].mxu0 %v349
  %v1010 = vpop.f32.mrb[0].mxu0
  %v1011 = vadd.f32 %v946, %v1010
  %v1012 = vpop.f32.mrb[0].mxu0
  %v1013 = vpop.f32.mrb[0].mxu0
  %v1014 = vadd.f32 %v949, %v1013
  %v1015 = vpop.f32.mrb[0].mxu0
  %1016 = vdwg.mxu0
  %1017 = vmatprep.subr.bf16.mxu0 0
  %1018 = vmatpush1.bf16.msra.mxu0 %v726
  %1019 = vmatprep.subr.bf16.mxu0 0
  %1020 = vmatpush1.bf16.msra.mxu0 %v727
  %1021 = vmatprep.subr.bf16.mxu0 0
  %1022 = vmatpush1.bf16.msra.mxu0 %v728
  %1023 = vmatprep.subr.bf16.mxu0 0
  %1024 = vmatpush1.bf16.msra.mxu0 %v729
  %1025 = vmatprep.subr.bf16.mxu0 0
  %1026 = vmatpush1.bf16.msra.mxu0 %v730
  %1027 = vmatprep.subr.bf16.mxu0 0
  %1028 = vmatpush1.bf16.msra.mxu0 %v731
  %1029 = vmatprep.subr.bf16.mxu0 0
  %1030 = vmatpush1.bf16.msra.mxu0 %v732
  %1031 = vmatprep.subr.bf16.mxu0 0
  %1032 = vmatpush1.bf16.msra.mxu0 %v733
  %1033 = vmatprep.subr.bf16.mxu0 0
  %1034 = vmatpush1.bf16.msra.mxu0 %v734
  %1035 = vmatprep.subr.bf16.mxu0 0
  %1036 = vmatpush1.bf16.msra.mxu0 %v735
  %1037 = vmatprep.subr.bf16.mxu0 0
  %1038 = vmatpush1.bf16.msra.mxu0 %v736
  %1039 = vmatprep.subr.bf16.mxu0 0
  %1040 = vmatpush1.bf16.msra.mxu0 %v737
  %1041 = vmatprep.subr.bf16.mxu0 0
  %1042 = vmatpush1.bf16.msra.mxu0 %v738
  %1043 = vmatprep.subr.bf16.mxu0 0
  %1044 = vmatpush1.bf16.msra.mxu0 %v739
  %1045 = vmatprep.subr.bf16.mxu0 0
  %1046 = vmatpush1.bf16.msra.mxu0 %v740
  %1047 = vmatprep.subr.bf16.mxu0 0
  %1048 = vmatpush1.bf16.msra.mxu0 %v741
  %1049 = vmatprep.mubr.bf16.mxu0 %v325
  %1050 = vmatmul.mubr.bf16.gmra.mrb[0].mxu0 %v324
  %v1051 = vpop.f32.mrb[0].mxu0
  %v1052 = vadd.f32 %v987, %v1051
  %v1053 = vpop.f32.mrb[0].mxu0
  %v1054 = vpop.f32.mrb[0].mxu0
  %v1055 = vadd.f32 %v990, %v1054
  %v1056 = vpop.f32.mrb[0].mxu0
  %1057 = vmatprep.mubr.bf16.mxu0 %v334
  %1058 = vmatmul.mubr.bf16.gmra.mrb[0].mxu0 %v333
  %v1059 = vpop.f32.mrb[0].mxu0
  %v1060 = vadd.f32 %v995, %v1059
  %v1061 = vpop.f32.mrb[0].mxu0
  %v1062 = vpop.f32.mrb[0].mxu0
  %v1063 = vadd.f32 %v998, %v1062
  %v1064 = vpop.f32.mrb[0].mxu0
  %1065 = vmatprep.mubr.bf16.mxu0 %v343
  %1066 = vmatmul.mubr.bf16.gmra.mrb[0].mxu0 %v342
  %v1067 = vpop.f32.mrb[0].mxu0
  %v1068 = vadd.f32 %v1003, %v1067
  %v1069 = vpop.f32.mrb[0].mxu0
  %v1070 = vpop.f32.mrb[0].mxu0
  %v1071 = vadd.f32 %v1006, %v1070
  %v1072 = vpop.f32.mrb[0].mxu0
  %1073 = vmatprep.mubr.bf16.mxu0 %v352
  %1074 = vmatmul.mubr.bf16.gmra.mrb[0].mxu0 %v351
  %v1075 = vpop.f32.mrb[0].mxu0
  %v1076 = vadd.f32 %v1011, %v1075
  %v1077 = vpop.f32.mrb[0].mxu0
  %v1078 = vpop.f32.mrb[0].mxu0
  %v1079 = vadd.f32 %v1014, %v1078
  %v1080 = vpop.f32.mrb[0].mxu0
  %1081 = vdwg.mxu0
  %1082 = vmatprep.subr.bf16.mxu0 0
  %1083 = vmatpush1.bf16.msra.mxu0 %v742
  %1084 = vmatprep.subr.bf16.mxu0 0
  %1085 = vmatpush1.bf16.msra.mxu0 %v743
  %1086 = vmatprep.subr.bf16.mxu0 0
  %1087 = vmatpush1.bf16.msra.mxu0 %v744
  %1088 = vmatprep.subr.bf16.mxu0 0
  %1089 = vmatpush1.bf16.msra.mxu0 %v745
  %1090 = vmatprep.subr.bf16.mxu0 0
  %1091 = vmatpush1.bf16.msra.mxu0 %v746
  %1092 = vmatprep.subr.bf16.mxu0 0
  %1093 = vmatpush1.bf16.msra.mxu0 %v747
  %1094 = vmatprep.subr.bf16.mxu0 0
  %1095 = vmatpush1.bf16.msra.mxu0 %v748
  %1096 = vmatprep.subr.bf16.mxu0 0
  %1097 = vmatpush1.bf16.msra.mxu0 %v749
  %1098 = vmatprep.subr.bf16.mxu0 0
  %1099 = vmatpush1.bf16.msra.mxu0 0
  %1100 = vmatprep.subr.bf16.mxu0 0
  %1101 = vmatpush1.bf16.msra.mxu0 0
  %1102 = vmatprep.subr.bf16.mxu0 0
  %1103 = vmatpush1.bf16.msra.mxu0 0
  %1104 = vmatprep.subr.bf16.mxu0 0
  %1105 = vmatpush1.bf16.msra.mxu0 0
  %1106 = vmatprep.subr.bf16.mxu0 0
  %1107 = vmatpush1.bf16.msra.mxu0 0
  %1108 = vmatprep.subr.bf16.mxu0 0
  %1109 = vmatpush1.bf16.msra.mxu0 0
  %1110 = vmatprep.subr.bf16.mxu0 0
  %1111 = vmatpush1.bf16.msra.mxu0 0
  %1112 = vmatprep.subr.bf16.mxu0 0
  %1113 = vmatpush1.bf16.msra.mxu0 0
  %1114 = vmatprep.mubr.bf16.mxu0 0
  %1115 = vmatmul.mubr.bf16.gmra.mrb[0].mxu0 %v326
  %v1116 = vpop.f32.mrb[0].mxu0
  %v1117 = vadd.f32 %v1052, %v1116
  %v1118 = vpop.f32.mrb[0].mxu0
  %v1119 = vpop.f32.mrb[0].mxu0
  %v1120 = vadd.f32 %v1055, %v1119
  %v1121 = vpop.f32.mrb[0].mxu0
  %1122 = vmatprep.mubr.bf16.mxu0 0
  %1123 = vmatmul.mubr.bf16.gmra.mrb[0].mxu0 %v335
  %v1124 = vpop.f32.mrb[0].mxu0
  %v1125 = vadd.f32 %v1060, %v1124
  %v1126 = vpop.f32.mrb[0].mxu0
  %v1127 = vpop.f32.mrb[0].mxu0
  %v1128 = vadd.f32 %v1063, %v1127
  %v1129 = vpop.f32.mrb[0].mxu0
  %1130 = vmatprep.mubr.bf16.mxu0 0
  %1131 = vmatmul.mubr.bf16.gmra.mrb[0].mxu0 %v344
  %v1132 = vpop.f32.mrb[0].mxu0
  %v1133 = vadd.f32 %v1068, %v1132
  %v1134 = vpop.f32.mrb[0].mxu0
  %v1135 = vpop.f32.mrb[0].mxu0
  %v1136 = vadd.f32 %v1071, %v1135
  %v1137 = vpop.f32.mrb[0].mxu0
  %1138 = vmatprep.mubr.bf16.mxu0 0
  %1139 = vmatmul.mubr.bf16.gmra.mrb[0].mxu0 %v353
  %v1140 = vpop.f32.mrb[0].mxu0
  %v1141 = vadd.f32 %v1076, %v1140
  %v1142 = vpop.f32.mrb[0].mxu0
  %v1143 = vpop.f32.mrb[0].mxu0
  %v1144 = vadd.f32 %v1079, %v1143
  %v1145 = vpop.f32.mrb[0].mxu0
  %1146 = vdwg.mxu0
  %v1147 = vmax.f32 %v1117, 0.0
  %v1148 = vmax.f32 %v1120, 0.0
  %v1149 = vmax.f32 %v1125, 0.0
  %v1150 = vmax.f32 %v1128, 0.0
  %v1151 = vmax.f32 %v1133, 0.0
  %v1152 = vmax.f32 %v1136, 0.0
  %v1153 = vmax.f32 %v1141, 0.0
  %v1154 = vmax.f32 %v1144, 0.0
  %v1155 = vpack.c.bf16 %v1148, %v1147
  %v1156 = vpack.c.bf16 %v1150, %v1149
  %v1157 = vpack.c.bf16 %v1152, %v1151
  %v1158 = vpack.c.bf16 %v1154, %v1153
  %v1163 = vunpack.c.l.b16 %v1155
  %v1164 = vunpack.c.h.b16 %v1155
  %v1165 = vunpack.c.l.b16 %v1156
  %v1166 = vunpack.c.h.b16 %v1156
  %v1167 = vunpack.c.l.b16 %v1157
  %v1168 = vunpack.c.h.b16 %v1157
  %v1169 = vunpack.c.l.b16 %v1158
  %v1170 = vunpack.c.h.b16 %v1158
  %v1171 = vpack.c.b16 %v1163, %v1163
  %v1172 = vpack.c.b16 %v1164, %v1164
  %v1173 = vpack.c.b16 %v1165, %v1165
  %v1174 = vpack.c.b16 %v1166, %v1166
  %v1175 = vpack.c.b16 %v1167, %v1167
  %v1176 = vpack.c.b16 %v1168, %v1168
  %v1177 = vpack.c.b16 %v1169, %v1169
  %v1178 = vpack.c.b16 %v1170, %v1170
  %1187 = vst [vmem:[%s3] sm:$0xf] %v1171
  %1188 = vst [vmem:[%s3 + $0x4] sm:$0xf] %v1172
  %1189 = vst [vmem:[%s3 + $0x8] sm:$0xf] %v1173
  %1190 = vst [vmem:[%s3 + $0xc] sm:$0xf] %v1174
  %1191 = vst [vmem:[%s3 + $0x10] sm:$0xf] %v1175
  %1192 = vst [vmem:[%s3 + $0x14] sm:$0xf] %v1176
  %1193 = vst [vmem:[%s3 + $0x18] sm:$0xf] %v1177
  %1194 = vst [vmem:[%s3 + $0x1c] sm:$0xf] %v1178
  // Predicated region
  $region14: #{detail_branch_forward.9} parent=0 // pred_check
    _
  $region15: #{detail_branch_forward.9} parent=0 // pred_check_branch
    %1196 = sbr.rel (0) target = $region17
  $region16: #{detail_branch_forward.9} parent=0 // pred_region
    _
  $region17: #{detail_branch_forward.9} parent=0 // pred_fallthru
    _
  // Predicated region
  $region18: #{detail_branch_forward.9} parent=0 // pred_check
    _
  $region19: #{detail_branch_forward.9} parent=0 // pred_check_branch
    %1198 = sbr.rel (0) target = $region21
  $region20: #{detail_branch_forward.9} parent=0 // pred_region
    _
  $region21: #{detail_branch_forward.9} parent=0 // pred_fallthru
    _

// kernel: detail_branch_forward.10
$region0: #{detail_branch_forward.10}
  #allocation0 [shape = 'u32[]', space=smem, size = 0x4, offset = 0x4, fixed_abs, tag = 'smem constant byte address 0x4 - core index']
  #allocation1 [shape = 'u32[144,128]{1,0:T(1,128)}', space=vmem, size = 0x12000, scoped, tag = 'internal scratch']
  %s0 = inlined_call_operand.vmem [shape: bf16[16,1152], index: 0, kind: input, shape index: {}]
  %s1 = inlined_call_operand.vmem [shape: bf16[1152,128], index: 1, kind: input, shape index: {}]
  %s2 = inlined_call_operand.vmem [shape: f32[1,128], index: 2, kind: input, shape index: {}]
  %s3 = inlined_call_operand.vmem [shape: bf16[16,128], index: 3, kind: output, shape index: {}]
  %s4 = sld [smem:[#allocation0]]
  $region22: #{detail_branch_forward.10} parent=0
    _
  %s6 = ssub.s32 1, %s4
  %s7 = scalar_select 0, %s6, %s4
  // Predicated region
  $region2: #{detail_branch_forward.10} parent=0 // pred_check
    _
  $region3: #{detail_branch_forward.10} parent=0 // pred_check_branch
    %9 = sbr.rel (0) target = $region5
  $region4: #{detail_branch_forward.10} parent=0 // pred_region
    _
  $region5: #{detail_branch_forward.10} parent=0 // pred_fallthru
    _
  // Predicated region
  $region6: #{detail_branch_forward.10} parent=0 // pred_check
    _
  $region7: #{detail_branch_forward.10} parent=0 // pred_check_branch
    %11 = sbr.rel (0) target = $region9
  $region8: #{detail_branch_forward.10} parent=0 // pred_region
    _
  $region9: #{detail_branch_forward.10} parent=0 // pred_fallthru
    _
  // Predicated region
  $region10: #{detail_branch_forward.10} parent=0 // pred_check
    _
  $region11: #{detail_branch_forward.10} parent=0 // pred_check_branch
    %13 = sbr.rel (0) target = $region13
  $region12: #{detail_branch_forward.10} parent=0 // pred_region
    _
  $region13: #{detail_branch_forward.10} parent=0 // pred_fallthru
    _
  %v15 = vld [vmem:[%s0] sm:$0xff]
  %v16 = vld [vmem:[%s0 + $0x8] sm:$0xff]
  %v17 = vld [vmem:[%s0 + $0x10] sm:$0xff]
  %v18 = vld [vmem:[%s0 + $0x18] sm:$0xff]
  %v19 = vld [vmem:[%s0 + $0x20] sm:$0xf]
  %v20 = vld [vmem:[%s0 + $0x24] sm:$0xff]
  %v21 = vld [vmem:[%s0 + $0x2c] sm:$0xff]
  %v22 = vld [vmem:[%s0 + $0x34] sm:$0xff]
  %v23 = vld [vmem:[%s0 + $0x3c] sm:$0xff]
  %v24 = vld [vmem:[%s0 + $0x44] sm:$0xf]
  %v25 = vld [vmem:[%s1] sm:$0xf]
  %v26 = vld [vmem:[%s1 + $0x4] sm:$0xf]
  %v27 = vld [vmem:[%s1 + $0x8] sm:$0xf]
  %v28 = vld [vmem:[%s1 + $0xc] sm:$0xf]
  %v29 = vld [vmem:[%s1 + $0x10] sm:$0xf]
  %v30 = vld [vmem:[%s1 + $0x14] sm:$0xf]
  %v31 = vld [vmem:[%s1 + $0x18] sm:$0xf]
  %v32 = vld [vmem:[%s1 + $0x1c] sm:$0xf]
  %v33 = vld [vmem:[%s1 + $0x20] sm:$0xf]
  %v34 = vld [vmem:[%s1 + $0x24] sm:$0xf]
  %v35 = vld [vmem:[%s1 + $0x28] sm:$0xf]
  %v36 = vld [vmem:[%s1 + $0x2c] sm:$0xf]
  %v37 = vld [vmem:[%s1 + $0x30] sm:$0xf]
  %v38 = vld [vmem:[%s1 + $0x34] sm:$0xf]
  %v39 = vld [vmem:[%s1 + $0x38] sm:$0xf]
  %v40 = vld [vmem:[%s1 + $0x3c] sm:$0xf]
  %v41 = vld [vmem:[%s1 + $0x40] sm:$0xf]
  %v42 = vld [vmem:[%s1 + $0x44] sm:$0xf]
  %v43 = vld [vmem:[%s1 + $0x48] sm:$0xf]
  %v44 = vld [vmem:[%s1 + $0x4c] sm:$0xf]
  %v45 = vld [vmem:[%s1 + $0x50] sm:$0xf]
  %v46 = vld [vmem:[%s1 + $0x54] sm:$0xf]
  %v47 = vld [vmem:[%s1 + $0x58] sm:$0xf]
  %v48 = vld [vmem:[%s1 + $0x5c] sm:$0xf]
  %v49 = vld [vmem:[%s1 + $0x60] sm:$0xf]
  %v50 = vld [vmem:[%s1 + $0x64] sm:$0xf]
  %v51 = vld [vmem:[%s1 + $0x68] sm:$0xf]
  %v52 = vld [vmem:[%s1 + $0x6c] sm:$0xf]
  %v53 = vld [vmem:[%s1 + $0x70] sm:$0xf]
  %v54 = vld [vmem:[%s1 + $0x74] sm:$0xf]
  %v55 = vld [vmem:[%s1 + $0x78] sm:$0xf]
  %v56 = vld [vmem:[%s1 + $0x7c] sm:$0xf]
  %v57 = vld [vmem:[%s1 + $0x80] sm:$0xf]
  %v58 = vld [vmem:[%s1 + $0x84] sm:$0xf]
  %v59 = vld [vmem:[%s1 + $0x88] sm:$0xf]
  %v60 = vld [vmem:[%s1 + $0x8c] sm:$0xf]
  %v61 = vld [vmem:[%s1 + $0x90] sm:$0xf]
  %v62 = vld [vmem:[%s1 + $0x94] sm:$0xf]
  %v63 = vld [vmem:[%s1 + $0x98] sm:$0xf]
  %v64 = vld [vmem:[%s1 + $0x9c] sm:$0xf]
  %v65 = vld [vmem:[%s1 + $0xa0] sm:$0xf]
  %v66 = vld [vmem:[%s1 + $0xa4] sm:$0xf]
  %v67 = vld [vmem:[%s1 + $0xa8] sm:$0xf]
  %v68 = vld [vmem:[%s1 + $0xac] sm:$0xf]
  %v69 = vld [vmem:[%s1 + $0xb0] sm:$0xf]
  %v70 = vld [vmem:[%s1 + $0xb4] sm:$0xf]
  %v71 = vld [vmem:[%s1 + $0xb8] sm:$0xf]
  %v72 = vld [vmem:[%s1 + $0xbc] sm:$0xf]
  %v73 = vld [vmem:[%s1 + $0xc0] sm:$0xf]
  %v74 = vld [vmem:[%s1 + $0xc4] sm:$0xf]
  %v75 = vld [vmem:[%s1 + $0xc8] sm:$0xf]
  %v76 = vld [vmem:[%s1 + $0xcc] sm:$0xf]
  %v77 = vld [vmem:[%s1 + $0xd0] sm:$0xf]
  %v78 = vld [vmem:[%s1 + $0xd4] sm:$0xf]
  %v79 = vld [vmem:[%s1 + $0xd8] sm:$0xf]
  %v80 = vld [vmem:[%s1 + $0xdc] sm:$0xf]
  %v81 = vld [vmem:[%s1 + $0xe0] sm:$0xf]
  %v82 = vld [vmem:[%s1 + $0xe4] sm:$0xf]
  %v83 = vld [vmem:[%s1 + $0xe8] sm:$0xf]
  %v84 = vld [vmem:[%s1 + $0xec] sm:$0xf]
  %v85 = vld [vmem:[%s1 + $0xf0] sm:$0xf]
  %v86 = vld [vmem:[%s1 + $0xf4] sm:$0xf]
  %v87 = vld [vmem:[%s1 + $0xf8] sm:$0xf]
  %v88 = vld [vmem:[%s1 + $0xfc] sm:$0xf]
  %v89 = vld [vmem:[%s1 + $0x100] sm:$0xf]
  %v90 = vld [vmem:[%s1 + $0x104] sm:$0xf]
  %v91 = vld [vmem:[%s1 + $0x108] sm:$0xf]
  %v92 = vld [vmem:[%s1 + $0x10c] sm:$0xf]
  %v93 = vld [vmem:[%s1 + $0x110] sm:$0xf]
  %v94 = vld [vmem:[%s1 + $0x114] sm:$0xf]
  %v95 = vld [vmem:[%s1 + $0x118] sm:$0xf]
  %v96 = vld [vmem:[%s1 + $0x11c] sm:$0xf]
  %v97 = vld [vmem:[%s1 + $0x120] sm:$0xf]
  %v98 = vld [vmem:[%s1 + $0x124] sm:$0xf]
  %v99 = vld [vmem:[%s1 + $0x128] sm:$0xf]
  %v100 = vld [vmem:[%s1 + $0x12c] sm:$0xf]
  %v101 = vld [vmem:[%s1 + $0x130] sm:$0xf]
  %v102 = vld [vmem:[%s1 + $0x134] sm:$0xf]
  %v103 = vld [vmem:[%s1 + $0x138] sm:$0xf]
  %v104 = vld [vmem:[%s1 + $0x13c] sm:$0xf]
  %v105 = vld [vmem:[%s1 + $0x140] sm:$0xf]
  %v106 = vld [vmem:[%s1 + $0x144] sm:$0xf]
  %v107 = vld [vmem:[%s1 + $0x148] sm:$0xf]
  %v108 = vld [vmem:[%s1 + $0x14c] sm:$0xf]
  %v109 = vld [vmem:[%s1 + $0x150] sm:$0xf]
  %v110 = vld [vmem:[%s1 + $0x154] sm:$0xf]
  %v111 = vld [vmem:[%s1 + $0x158] sm:$0xf]
  %v112 = vld [vmem:[%s1 + $0x15c] sm:$0xf]
  %v113 = vld [vmem:[%s1 + $0x160] sm:$0xf]
  %v114 = vld [vmem:[%s1 + $0x164] sm:$0xf]
  %v115 = vld [vmem:[%s1 + $0x168] sm:$0xf]
  %v116 = vld [vmem:[%s1 + $0x16c] sm:$0xf]
  %v117 = vld [vmem:[%s1 + $0x170] sm:$0xf]
  %v118 = vld [vmem:[%s1 + $0x174] sm:$0xf]
  %v119 = vld [vmem:[%s1 + $0x178] sm:$0xf]
  %v120 = vld [vmem:[%s1 + $0x17c] sm:$0xf]
  %v121 = vld [vmem:[%s1 + $0x180] sm:$0xf]
  %v122 = vld [vmem:[%s1 + $0x184] sm:$0xf]
  %v123 = vld [vmem:[%s1 + $0x188] sm:$0xf]
  %v124 = vld [vmem:[%s1 + $0x18c] sm:$0xf]
  %v125 = vld [vmem:[%s1 + $0x190] sm:$0xf]
  %v126 = vld [vmem:[%s1 + $0x194] sm:$0xf]
  %v127 = vld [vmem:[%s1 + $0x198] sm:$0xf]
  %v128 = vld [vmem:[%s1 + $0x19c] sm:$0xf]
  %v129 = vld [vmem:[%s1 + $0x1a0] sm:$0xf]
  %v130 = vld [vmem:[%s1 + $0x1a4] sm:$0xf]
  %v131 = vld [vmem:[%s1 + $0x1a8] sm:$0xf]
  %v132 = vld [vmem:[%s1 + $0x1ac] sm:$0xf]
  %v133 = vld [vmem:[%s1 + $0x1b0] sm:$0xf]
  %v134 = vld [vmem:[%s1 + $0x1b4] sm:$0xf]
  %v135 = vld [vmem:[%s1 + $0x1b8] sm:$0xf]
  %v136 = vld [vmem:[%s1 + $0x1bc] sm:$0xf]
  %v137 = vld [vmem:[%s1 + $0x1c0] sm:$0xf]
  %v138 = vld [vmem:[%s1 + $0x1c4] sm:$0xf]
  %v139 = vld [vmem:[%s1 + $0x1c8] sm:$0xf]
  %v140 = vld [vmem:[%s1 + $0x1cc] sm:$0xf]
  %v141 = vld [vmem:[%s1 + $0x1d0] sm:$0xf]
  %v142 = vld [vmem:[%s1 + $0x1d4] sm:$0xf]
  %v143 = vld [vmem:[%s1 + $0x1d8] sm:$0xf]
  %v144 = vld [vmem:[%s1 + $0x1dc] sm:$0xf]
  %v145 = vld [vmem:[%s1 + $0x1e0] sm:$0xf]
  %v146 = vld [vmem:[%s1 + $0x1e4] sm:$0xf]
  %v147 = vld [vmem:[%s1 + $0x1e8] sm:$0xf]
  %v148 = vld [vmem:[%s1 + $0x1ec] sm:$0xf]
  %v149 = vld [vmem:[%s1 + $0x1f0] sm:$0xf]
  %v150 = vld [vmem:[%s1 + $0x1f4] sm:$0xf]
  %v151 = vld [vmem:[%s1 + $0x1f8] sm:$0xf]
  %v152 = vld [vmem:[%s1 + $0x1fc] sm:$0xf]
  %v153 = vld [vmem:[%s1 + $0x200] sm:$0xf]
  %v154 = vld [vmem:[%s1 + $0x204] sm:$0xf]
  %v155 = vld [vmem:[%s1 + $0x208] sm:$0xf]
  %v156 = vld [vmem:[%s1 + $0x20c] sm:$0xf]
  %v157 = vld [vmem:[%s1 + $0x210] sm:$0xf]
  %v158 = vld [vmem:[%s1 + $0x214] sm:$0xf]
  %v159 = vld [vmem:[%s1 + $0x218] sm:$0xf]
  %v160 = vld [vmem:[%s1 + $0x21c] sm:$0xf]
  %v161 = vld [vmem:[%s1 + $0x220] sm:$0xf]
  %v162 = vld [vmem:[%s1 + $0x224] sm:$0xf]
  %v163 = vld [vmem:[%s1 + $0x228] sm:$0xf]
  %v164 = vld [vmem:[%s1 + $0x22c] sm:$0xf]
  %v165 = vld [vmem:[%s1 + $0x230] sm:$0xf]
  %v166 = vld [vmem:[%s1 + $0x234] sm:$0xf]
  %v167 = vld [vmem:[%s1 + $0x238] sm:$0xf]
  %v168 = vld [vmem:[%s1 + $0x23c] sm:$0xf]
  %v169 = vld [vmem:[%s2] sm:$0x1]
  %v171 = vlaneseq
  %v172 = vshrl.u32 %v171, 7
  %v173 = vsub.s32 0, %v172
  %v174 = vrot.slane %v169, %v173
  %v186 = vunpack.c.l.b16 %v15
  %v187 = vunpack.c.h.b16 %v15
  %v188 = vunpack.c.l.b16 %v16
  %v189 = vunpack.c.h.b16 %v16
  %v190 = vunpack.c.l.b16 %v17
  %v191 = vunpack.c.h.b16 %v17
  %v192 = vunpack.c.l.b16 %v18
  %v193 = vunpack.c.h.b16 %v18
  %v194 = vunpack.c.l.b16 %v19
  %v195 = vunpack.c.l.b16 %v20
  %v196 = vunpack.c.h.b16 %v20
  %v197 = vunpack.c.l.b16 %v21
  %v198 = vunpack.c.h.b16 %v21
  %v199 = vunpack.c.l.b16 %v22
  %v200 = vunpack.c.h.b16 %v22
  %v201 = vunpack.c.l.b16 %v23
  %v202 = vunpack.c.h.b16 %v23
  %v203 = vunpack.c.l.b16 %v24
  %v204 = vpack.c.b16 %v195, %v186
  %v205 = vpack.c.b16 %v196, %v187
  %v206 = vpack.c.b16 %v197, %v188
  %v207 = vpack.c.b16 %v198, %v189
  %v208 = vpack.c.b16 %v199, %v190
  %v209 = vpack.c.b16 %v200, %v191
  %v210 = vpack.c.b16 %v201, %v192
  %v211 = vpack.c.b16 %v202, %v193
  %v212 = vpack.c.b16 %v203, %v194
  %v366 = vunpack.c.l.b16 %v25
  %v367 = vunpack.c.l.b16 %v26
  %v368 = vunpack.c.l.b16 %v27
  %v369 = vunpack.c.l.b16 %v28
  %v370 = vunpack.c.l.b16 %v29
  %v371 = vunpack.c.l.b16 %v30
  %v372 = vunpack.c.l.b16 %v31
  %v373 = vunpack.c.l.b16 %v32
  %v374 = vunpack.c.l.b16 %v33
  %v375 = vunpack.c.l.b16 %v34
  %v376 = vunpack.c.l.b16 %v35
  %v377 = vunpack.c.l.b16 %v36
  %v378 = vunpack.c.l.b16 %v37
  %v379 = vunpack.c.l.b16 %v38
  %v380 = vunpack.c.l.b16 %v39
  %v381 = vunpack.c.l.b16 %v40
  %v382 = vunpack.c.l.b16 %v41
  %v383 = vunpack.c.l.b16 %v42
  %v384 = vunpack.c.l.b16 %v43
  %v385 = vunpack.c.l.b16 %v44
  %v386 = vunpack.c.l.b16 %v45
  %v387 = vunpack.c.l.b16 %v46
  %v388 = vunpack.c.l.b16 %v47
  %v389 = vunpack.c.l.b16 %v48
  %v390 = vunpack.c.l.b16 %v49
  %v391 = vunpack.c.l.b16 %v50
  %v392 = vunpack.c.l.b16 %v51
  %v393 = vunpack.c.l.b16 %v52
  %v394 = vunpack.c.l.b16 %v53
  %v395 = vunpack.c.l.b16 %v54
  %v396 = vunpack.c.l.b16 %v55
  %v397 = vunpack.c.l.b16 %v56
  %v398 = vunpack.c.l.b16 %v57
  %v399 = vunpack.c.l.b16 %v58
  %v400 = vunpack.c.l.b16 %v59
  %v401 = vunpack.c.l.b16 %v60
  %v402 = vunpack.c.l.b16 %v61
  %v403 = vunpack.c.l.b16 %v62
  %v404 = vunpack.c.l.b16 %v63
  %v405 = vunpack.c.l.b16 %v64
  %v406 = vunpack.c.l.b16 %v65
  %v407 = vunpack.c.l.b16 %v66
  %v408 = vunpack.c.l.b16 %v67
  %v409 = vunpack.c.l.b16 %v68
  %v410 = vunpack.c.l.b16 %v69
  %v411 = vunpack.c.l.b16 %v70
  %v412 = vunpack.c.l.b16 %v71
  %v413 = vunpack.c.l.b16 %v72
  %v414 = vunpack.c.l.b16 %v73
  %v415 = vunpack.c.l.b16 %v74
  %v416 = vunpack.c.l.b16 %v75
  %v417 = vunpack.c.l.b16 %v76
  %v418 = vunpack.c.l.b16 %v77
  %v419 = vunpack.c.l.b16 %v78
  %v420 = vunpack.c.l.b16 %v79
  %v421 = vunpack.c.l.b16 %v80
  %v422 = vunpack.c.l.b16 %v81
  %v423 = vunpack.c.l.b16 %v82
  %v424 = vunpack.c.l.b16 %v83
  %v425 = vunpack.c.l.b16 %v84
  %v426 = vunpack.c.l.b16 %v85
  %v427 = vunpack.c.l.b16 %v86
  %v428 = vunpack.c.l.b16 %v87
  %v429 = vunpack.c.l.b16 %v88
  %v430 = vunpack.c.l.b16 %v89
  %v431 = vunpack.c.l.b16 %v90
  %v432 = vunpack.c.l.b16 %v91
  %v433 = vunpack.c.l.b16 %v92
  %v434 = vunpack.c.l.b16 %v93
  %v435 = vunpack.c.l.b16 %v94
  %v436 = vunpack.c.l.b16 %v95
  %v437 = vunpack.c.l.b16 %v96
  %v438 = vunpack.c.l.b16 %v97
  %v439 = vunpack.c.l.b16 %v98
  %v440 = vunpack.c.l.b16 %v99
  %v441 = vunpack.c.l.b16 %v100
  %v442 = vunpack.c.l.b16 %v101
  %v443 = vunpack.c.l.b16 %v102
  %v444 = vunpack.c.l.b16 %v103
  %v445 = vunpack.c.l.b16 %v104
  %v446 = vunpack.c.l.b16 %v105
  %v447 = vunpack.c.l.b16 %v106
  %v448 = vunpack.c.l.b16 %v107
  %v449 = vunpack.c.l.b16 %v108
  %v450 = vunpack.c.l.b16 %v109
  %v451 = vunpack.c.l.b16 %v110
  %v452 = vunpack.c.l.b16 %v111
  %v453 = vunpack.c.l.b16 %v112
  %v454 = vunpack.c.l.b16 %v113
  %v455 = vunpack.c.l.b16 %v114
  %v456 = vunpack.c.l.b16 %v115
  %v457 = vunpack.c.l.b16 %v116
  %v458 = vunpack.c.l.b16 %v117
  %v459 = vunpack.c.l.b16 %v118
  %v460 = vunpack.c.l.b16 %v119
  %v461 = vunpack.c.l.b16 %v120
  %v462 = vunpack.c.l.b16 %v121
  %v463 = vunpack.c.l.b16 %v122
  %v464 = vunpack.c.l.b16 %v123
  %v465 = vunpack.c.l.b16 %v124
  %v466 = vunpack.c.l.b16 %v125
  %v467 = vunpack.c.l.b16 %v126
  %v468 = vunpack.c.l.b16 %v127
  %v469 = vunpack.c.l.b16 %v128
  %v470 = vunpack.c.l.b16 %v129
  %v471 = vunpack.c.l.b16 %v130
  %v472 = vunpack.c.l.b16 %v131
  %v473 = vunpack.c.l.b16 %v132
  %v474 = vunpack.c.l.b16 %v133
  %v475 = vunpack.c.l.b16 %v134
  %v476 = vunpack.c.l.b16 %v135
  %v477 = vunpack.c.l.b16 %v136
  %v478 = vunpack.c.l.b16 %v137
  %v479 = vunpack.c.l.b16 %v138
  %v480 = vunpack.c.l.b16 %v139
  %v481 = vunpack.c.l.b16 %v140
  %v482 = vunpack.c.l.b16 %v141
  %v483 = vunpack.c.l.b16 %v142
  %v484 = vunpack.c.l.b16 %v143
  %v485 = vunpack.c.l.b16 %v144
  %v486 = vunpack.c.l.b16 %v145
  %v487 = vunpack.c.l.b16 %v146
  %v488 = vunpack.c.l.b16 %v147
  %v489 = vunpack.c.l.b16 %v148
  %v490 = vunpack.c.l.b16 %v149
  %v491 = vunpack.c.l.b16 %v150
  %v492 = vunpack.c.l.b16 %v151
  %v493 = vunpack.c.l.b16 %v152
  %v494 = vunpack.c.l.b16 %v153
  %v495 = vunpack.c.l.b16 %v154
  %v496 = vunpack.c.l.b16 %v155
  %v497 = vunpack.c.l.b16 %v156
  %v498 = vunpack.c.l.b16 %v157
  %v499 = vunpack.c.l.b16 %v158
  %v500 = vunpack.c.l.b16 %v159
  %v501 = vunpack.c.l.b16 %v160
  %v502 = vunpack.c.l.b16 %v161
  %v503 = vunpack.c.l.b16 %v162
  %v504 = vunpack.c.l.b16 %v163
  %v505 = vunpack.c.l.b16 %v164
  %v506 = vunpack.c.l.b16 %v165
  %v507 = vunpack.c.l.b16 %v166
  %v508 = vunpack.c.l.b16 %v167
  %v509 = vunpack.c.l.b16 %v168
  %v510 = vpack.c.b16 %v367, %v366
  %v511 = vpack.c.b16 %v369, %v368
  %v512 = vpack.c.b16 %v371, %v370
  %v513 = vpack.c.b16 %v373, %v372
  %v514 = vpack.c.b16 %v375, %v374
  %v515 = vpack.c.b16 %v377, %v376
  %v516 = vpack.c.b16 %v379, %v378
  %v517 = vpack.c.b16 %v381, %v380
  %v518 = vpack.c.b16 %v383, %v382
  %v519 = vpack.c.b16 %v385, %v384
  %v520 = vpack.c.b16 %v387, %v386
  %v521 = vpack.c.b16 %v389, %v388
  %v522 = vpack.c.b16 %v391, %v390
  %v523 = vpack.c.b16 %v393, %v392
  %v524 = vpack.c.b16 %v395, %v394
  %v525 = vpack.c.b16 %v397, %v396
  %v526 = vpack.c.b16 %v399, %v398
  %v527 = vpack.c.b16 %v401, %v400
  %v528 = vpack.c.b16 %v403, %v402
  %v529 = vpack.c.b16 %v405, %v404
  %v530 = vpack.c.b16 %v407, %v406
  %v531 = vpack.c.b16 %v409, %v408
  %v532 = vpack.c.b16 %v411, %v410
  %v533 = vpack.c.b16 %v413, %v412
  %v534 = vpack.c.b16 %v415, %v414
  %v535 = vpack.c.b16 %v417, %v416
  %v536 = vpack.c.b16 %v419, %v418
  %v537 = vpack.c.b16 %v421, %v420
  %v538 = vpack.c.b16 %v423, %v422
  %v539 = vpack.c.b16 %v425, %v424
  %v540 = vpack.c.b16 %v427, %v426
  %v541 = vpack.c.b16 %v429, %v428
  %v542 = vpack.c.b16 %v431, %v430
  %v543 = vpack.c.b16 %v433, %v432
  %v544 = vpack.c.b16 %v435, %v434
  %v545 = vpack.c.b16 %v437, %v436
  %v546 = vpack.c.b16 %v439, %v438
  %v547 = vpack.c.b16 %v441, %v440
  %v548 = vpack.c.b16 %v443, %v442
  %v549 = vpack.c.b16 %v445, %v444
  %v550 = vpack.c.b16 %v447, %v446
  %v551 = vpack.c.b16 %v449, %v448
  %v552 = vpack.c.b16 %v451, %v450
  %v553 = vpack.c.b16 %v453, %v452
  %v554 = vpack.c.b16 %v455, %v454
  %v555 = vpack.c.b16 %v457, %v456
  %v556 = vpack.c.b16 %v459, %v458
  %v557 = vpack.c.b16 %v461, %v460
  %v558 = vpack.c.b16 %v463, %v462
  %v559 = vpack.c.b16 %v465, %v464
  %v560 = vpack.c.b16 %v467, %v466
  %v561 = vpack.c.b16 %v469, %v468
  %v562 = vpack.c.b16 %v471, %v470
  %v563 = vpack.c.b16 %v473, %v472
  %v564 = vpack.c.b16 %v475, %v474
  %v565 = vpack.c.b16 %v477, %v476
  %v566 = vpack.c.b16 %v479, %v478
  %v567 = vpack.c.b16 %v481, %v480
  %v568 = vpack.c.b16 %v483, %v482
  %v569 = vpack.c.b16 %v485, %v484
  %v570 = vpack.c.b16 %v487, %v486
  %v571 = vpack.c.b16 %v489, %v488
  %v572 = vpack.c.b16 %v491, %v490
  %v573 = vpack.c.b16 %v493, %v492
  %v574 = vpack.c.b16 %v495, %v494
  %v575 = vpack.c.b16 %v497, %v496
  %v576 = vpack.c.b16 %v499, %v498
  %v577 = vpack.c.b16 %v501, %v500
  %v578 = vpack.c.b16 %v503, %v502
  %v579 = vpack.c.b16 %v505, %v504
  %v580 = vpack.c.b16 %v507, %v506
  %v581 = vpack.c.b16 %v509, %v508
  %654 = vmatprep.subr.bf16.mxu0 0
  %655 = vmatpush1.bf16.msra.mxu0 %v510
  %656 = vmatprep.subr.bf16.mxu0 0
  %657 = vmatpush1.bf16.msra.mxu0 %v511
  %658 = vmatprep.subr.bf16.mxu0 0
  %659 = vmatpush1.bf16.msra.mxu0 %v512
  %660 = vmatprep.subr.bf16.mxu0 0
  %661 = vmatpush1.bf16.msra.mxu0 %v513
  %662 = vmatprep.subr.bf16.mxu0 0
  %663 = vmatpush1.bf16.msra.mxu0 %v514
  %664 = vmatprep.subr.bf16.mxu0 0
  %665 = vmatpush1.bf16.msra.mxu0 %v515
  %666 = vmatprep.subr.bf16.mxu0 0
  %667 = vmatpush1.bf16.msra.mxu0 %v516
  %668 = vmatprep.subr.bf16.mxu0 0
  %669 = vmatpush1.bf16.msra.mxu0 %v517
  %670 = vmatprep.subr.bf16.mxu0 0
  %671 = vmatpush1.bf16.msra.mxu0 %v518
  %672 = vmatprep.subr.bf16.mxu0 0
  %673 = vmatpush1.bf16.msra.mxu0 %v519
  %674 = vmatprep.subr.bf16.mxu0 0
  %675 = vmatpush1.bf16.msra.mxu0 %v520
  %676 = vmatprep.subr.bf16.mxu0 0
  %677 = vmatpush1.bf16.msra.mxu0 %v521
  %678 = vmatprep.subr.bf16.mxu0 0
  %679 = vmatpush1.bf16.msra.mxu0 %v522
  %680 = vmatprep.subr.bf16.mxu0 0
  %681 = vmatpush1.bf16.msra.mxu0 %v523
  %682 = vmatprep.subr.bf16.mxu0 0
  %683 = vmatpush1.bf16.msra.mxu0 %v524
  %684 = vmatprep.subr.bf16.mxu0 0
  %685 = vmatpush1.bf16.msra.mxu0 %v525
  %686 = vmatprep.mubr.bf16.mxu0 %v205
  %687 = vmatmul.mubr.bf16.gmra.mrb[0].mxu0 %v204
  %v688 = vpop.f32.mrb[0].mxu0
  %v689 = vadd.f32 %v174, %v688
  %v690 = vpop.f32.mrb[0].mxu0
  %v691 = vpop.f32.mrb[0].mxu0
  %v692 = vadd.f32 %v174, %v691
  %v693 = vpop.f32.mrb[0].mxu0
  %694 = vdwg.mxu0
  %695 = vmatprep.subr.bf16.mxu0 0
  %696 = vmatpush1.bf16.msra.mxu0 %v526
  %697 = vmatprep.subr.bf16.mxu0 0
  %698 = vmatpush1.bf16.msra.mxu0 %v527
  %699 = vmatprep.subr.bf16.mxu0 0
  %700 = vmatpush1.bf16.msra.mxu0 %v528
  %701 = vmatprep.subr.bf16.mxu0 0
  %702 = vmatpush1.bf16.msra.mxu0 %v529
  %703 = vmatprep.subr.bf16.mxu0 0
  %704 = vmatpush1.bf16.msra.mxu0 %v530
  %705 = vmatprep.subr.bf16.mxu0 0
  %706 = vmatpush1.bf16.msra.mxu0 %v531
  %707 = vmatprep.subr.bf16.mxu0 0
  %708 = vmatpush1.bf16.msra.mxu0 %v532
  %709 = vmatprep.subr.bf16.mxu0 0
  %710 = vmatpush1.bf16.msra.mxu0 %v533
  %711 = vmatprep.subr.bf16.mxu0 0
  %712 = vmatpush1.bf16.msra.mxu0 %v534
  %713 = vmatprep.subr.bf16.mxu0 0
  %714 = vmatpush1.bf16.msra.mxu0 %v535
  %715 = vmatprep.subr.bf16.mxu0 0
  %716 = vmatpush1.bf16.msra.mxu0 %v536
  %717 = vmatprep.subr.bf16.mxu0 0
  %718 = vmatpush1.bf16.msra.mxu0 %v537
  %719 = vmatprep.subr.bf16.mxu0 0
  %720 = vmatpush1.bf16.msra.mxu0 %v538
  %721 = vmatprep.subr.bf16.mxu0 0
  %722 = vmatpush1.bf16.msra.mxu0 %v539
  %723 = vmatprep.subr.bf16.mxu0 0
  %724 = vmatpush1.bf16.msra.mxu0 %v540
  %725 = vmatprep.subr.bf16.mxu0 0
  %726 = vmatpush1.bf16.msra.mxu0 %v541
  %727 = vmatprep.mubr.bf16.mxu0 %v207
  %728 = vmatmul.mubr.bf16.gmra.mrb[0].mxu0 %v206
  %v729 = vpop.f32.mrb[0].mxu0
  %v730 = vadd.f32 %v689, %v729
  %v731 = vpop.f32.mrb[0].mxu0
  %v732 = vpop.f32.mrb[0].mxu0
  %v733 = vadd.f32 %v692, %v732
  %v734 = vpop.f32.mrb[0].mxu0
  %735 = vdwg.mxu0
  %736 = vmatprep.subr.bf16.mxu0 0
  %737 = vmatpush1.bf16.msra.mxu0 %v542
  %738 = vmatprep.subr.bf16.mxu0 0
  %739 = vmatpush1.bf16.msra.mxu0 %v543
  %740 = vmatprep.subr.bf16.mxu0 0
  %741 = vmatpush1.bf16.msra.mxu0 %v544
  %742 = vmatprep.subr.bf16.mxu0 0
  %743 = vmatpush1.bf16.msra.mxu0 %v545
  %744 = vmatprep.subr.bf16.mxu0 0
  %745 = vmatpush1.bf16.msra.mxu0 %v546
  %746 = vmatprep.subr.bf16.mxu0 0
  %747 = vmatpush1.bf16.msra.mxu0 %v547
  %748 = vmatprep.subr.bf16.mxu0 0
  %749 = vmatpush1.bf16.msra.mxu0 %v548
  %750 = vmatprep.subr.bf16.mxu0 0
  %751 = vmatpush1.bf16.msra.mxu0 %v549
  %752 = vmatprep.subr.bf16.mxu0 0
  %753 = vmatpush1.bf16.msra.mxu0 %v550
  %754 = vmatprep.subr.bf16.mxu0 0
  %755 = vmatpush1.bf16.msra.mxu0 %v551
  %756 = vmatprep.subr.bf16.mxu0 0
  %757 = vmatpush1.bf16.msra.mxu0 %v552
  %758 = vmatprep.subr.bf16.mxu0 0
  %759 = vmatpush1.bf16.msra.mxu0 %v553
  %760 = vmatprep.subr.bf16.mxu0 0
  %761 = vmatpush1.bf16.msra.mxu0 %v554
  %762 = vmatprep.subr.bf16.mxu0 0
  %763 = vmatpush1.bf16.msra.mxu0 %v555
  %764 = vmatprep.subr.bf16.mxu0 0
  %765 = vmatpush1.bf16.msra.mxu0 %v556
  %766 = vmatprep.subr.bf16.mxu0 0
  %767 = vmatpush1.bf16.msra.mxu0 %v557
  %768 = vmatprep.mubr.bf16.mxu0 %v209
  %769 = vmatmul.mubr.bf16.gmra.mrb[0].mxu0 %v208
  %v770 = vpop.f32.mrb[0].mxu0
  %v771 = vadd.f32 %v730, %v770
  %v772 = vpop.f32.mrb[0].mxu0
  %v773 = vpop.f32.mrb[0].mxu0
  %v774 = vadd.f32 %v733, %v773
  %v775 = vpop.f32.mrb[0].mxu0
  %776 = vdwg.mxu0
  %777 = vmatprep.subr.bf16.mxu0 0
  %778 = vmatpush1.bf16.msra.mxu0 %v558
  %779 = vmatprep.subr.bf16.mxu0 0
  %780 = vmatpush1.bf16.msra.mxu0 %v559
  %781 = vmatprep.subr.bf16.mxu0 0
  %782 = vmatpush1.bf16.msra.mxu0 %v560
  %783 = vmatprep.subr.bf16.mxu0 0
  %784 = vmatpush1.bf16.msra.mxu0 %v561
  %785 = vmatprep.subr.bf16.mxu0 0
  %786 = vmatpush1.bf16.msra.mxu0 %v562
  %787 = vmatprep.subr.bf16.mxu0 0
  %788 = vmatpush1.bf16.msra.mxu0 %v563
  %789 = vmatprep.subr.bf16.mxu0 0
  %790 = vmatpush1.bf16.msra.mxu0 %v564
  %791 = vmatprep.subr.bf16.mxu0 0
  %792 = vmatpush1.bf16.msra.mxu0 %v565
  %793 = vmatprep.subr.bf16.mxu0 0
  %794 = vmatpush1.bf16.msra.mxu0 %v566
  %795 = vmatprep.subr.bf16.mxu0 0
  %796 = vmatpush1.bf16.msra.mxu0 %v567
  %797 = vmatprep.subr.bf16.mxu0 0
  %798 = vmatpush1.bf16.msra.mxu0 %v568
  %799 = vmatprep.subr.bf16.mxu0 0
  %800 = vmatpush1.bf16.msra.mxu0 %v569
  %801 = vmatprep.subr.bf16.mxu0 0
  %802 = vmatpush1.bf16.msra.mxu0 %v570
  %803 = vmatprep.subr.bf16.mxu0 0
  %804 = vmatpush1.bf16.msra.mxu0 %v571
  %805 = vmatprep.subr.bf16.mxu0 0
  %806 = vmatpush1.bf16.msra.mxu0 %v572
  %807 = vmatprep.subr.bf16.mxu0 0
  %808 = vmatpush1.bf16.msra.mxu0 %v573
  %809 = vmatprep.mubr.bf16.mxu0 %v211
  %810 = vmatmul.mubr.bf16.gmra.mrb[0].mxu0 %v210
  %v811 = vpop.f32.mrb[0].mxu0
  %v812 = vadd.f32 %v771, %v811
  %v813 = vpop.f32.mrb[0].mxu0
  %v814 = vpop.f32.mrb[0].mxu0
  %v815 = vadd.f32 %v774, %v814
  %v816 = vpop.f32.mrb[0].mxu0
  %817 = vdwg.mxu0
  %818 = vmatprep.subr.bf16.mxu0 0
  %819 = vmatpush1.bf16.msra.mxu0 %v574
  %820 = vmatprep.subr.bf16.mxu0 0
  %821 = vmatpush1.bf16.msra.mxu0 %v575
  %822 = vmatprep.subr.bf16.mxu0 0
  %823 = vmatpush1.bf16.msra.mxu0 %v576
  %824 = vmatprep.subr.bf16.mxu0 0
  %825 = vmatpush1.bf16.msra.mxu0 %v577
  %826 = vmatprep.subr.bf16.mxu0 0
  %827 = vmatpush1.bf16.msra.mxu0 %v578
  %828 = vmatprep.subr.bf16.mxu0 0
  %829 = vmatpush1.bf16.msra.mxu0 %v579
  %830 = vmatprep.subr.bf16.mxu0 0
  %831 = vmatpush1.bf16.msra.mxu0 %v580
  %832 = vmatprep.subr.bf16.mxu0 0
  %833 = vmatpush1.bf16.msra.mxu0 %v581
  %834 = vmatprep.subr.bf16.mxu0 0
  %835 = vmatpush1.bf16.msra.mxu0 0
  %836 = vmatprep.subr.bf16.mxu0 0
  %837 = vmatpush1.bf16.msra.mxu0 0
  %838 = vmatprep.subr.bf16.mxu0 0
  %839 = vmatpush1.bf16.msra.mxu0 0
  %840 = vmatprep.subr.bf16.mxu0 0
  %841 = vmatpush1.bf16.msra.mxu0 0
  %842 = vmatprep.subr.bf16.mxu0 0
  %843 = vmatpush1.bf16.msra.mxu0 0
  %844 = vmatprep.subr.bf16.mxu0 0
  %845 = vmatpush1.bf16.msra.mxu0 0
  %846 = vmatprep.subr.bf16.mxu0 0
  %847 = vmatpush1.bf16.msra.mxu0 0
  %848 = vmatprep.subr.bf16.mxu0 0
  %849 = vmatpush1.bf16.msra.mxu0 0
  %850 = vmatprep.mubr.bf16.mxu0 0
  %851 = vmatmul.mubr.bf16.gmra.mrb[0].mxu0 %v212
  %v852 = vpop.f32.mrb[0].mxu0
  %v853 = vadd.f32 %v812, %v852
  %v854 = vpop.f32.mrb[0].mxu0
  %v855 = vpop.f32.mrb[0].mxu0
  %v856 = vadd.f32 %v815, %v855
  %v857 = vpop.f32.mrb[0].mxu0
  %858 = vdwg.mxu0
  %v859 = vmax.f32 %v853, 0.0
  %v860 = vmax.f32 %v856, 0.0
  %v861 = vpack.c.bf16 %v860, %v859
  %v863 = vunpack.c.l.b16 %v861
  %v864 = vunpack.c.h.b16 %v861
  %v865 = vpack.c.b16 %v863, %v863
  %v866 = vpack.c.b16 %v864, %v864
  %869 = vst [vmem:[%s3] sm:$0xf] %v865
  %870 = vst [vmem:[%s3 + $0x4] sm:$0xf] %v866
  // Predicated region
  $region14: #{detail_branch_forward.10} parent=0 // pred_check
    _
  $region15: #{detail_branch_forward.10} parent=0 // pred_check_branch
    %872 = sbr.rel (0) target = $region17
  $region16: #{detail_branch_forward.10} parent=0 // pred_region
    _
  $region17: #{detail_branch_forward.10} parent=0 // pred_fallthru
    _
  // Predicated region
  $region18: #{detail_branch_forward.10} parent=0 // pred_check
    _
  $region19: #{detail_branch_forward.10} parent=0 // pred_check_branch
    %874 = sbr.rel (0) target = $region21
  $region20: #{detail_branch_forward.10} parent=0 // pred_region
    _
  $region21: #{detail_branch_forward.10} parent=0 // pred_fallthru
    _

// kernel: detail_branch_forward.13
$region0: #{detail_branch_forward.13}
  #allocation0 [shape = 'u32[]', space=smem, size = 0x4, offset = 0x4, fixed_abs, tag = 'smem constant byte address 0x4 - core index']
  #allocation1 [shape = 'u32[144,128]{1,0:T(1,128)}', space=vmem, size = 0x12000, scoped, tag = 'internal scratch']
  %s0 = inlined_call_operand.vmem [shape: bf16[16,576], index: 0, kind: input, shape index: {}]
  %s1 = inlined_call_operand.vmem [shape: bf16[576,128], index: 1, kind: input, shape index: {}]
  %s2 = inlined_call_operand.vmem [shape: f32[1,128], index: 2, kind: input, shape index: {}]
  %s3 = inlined_call_operand.vmem [shape: bf16[16,128], index: 3, kind: output, shape index: {}]
  %s4 = sld [smem:[#allocation0]]
  $region22: #{detail_branch_forward.13} parent=0
    _
  %s6 = ssub.s32 1, %s4
  %s7 = scalar_select 0, %s6, %s4
  // Predicated region
  $region2: #{detail_branch_forward.13} parent=0 // pred_check
    _
  $region3: #{detail_branch_forward.13} parent=0 // pred_check_branch
    %9 = sbr.rel (0) target = $region5
  $region4: #{detail_branch_forward.13} parent=0 // pred_region
    _
  $region5: #{detail_branch_forward.13} parent=0 // pred_fallthru
    _
  // Predicated region
  $region6: #{detail_branch_forward.13} parent=0 // pred_check
    _
  $region7: #{detail_branch_forward.13} parent=0 // pred_check_branch
    %11 = sbr.rel (0) target = $region9
  $region8: #{detail_branch_forward.13} parent=0 // pred_region
    _
  $region9: #{detail_branch_forward.13} parent=0 // pred_fallthru
    _
  // Predicated region
  $region10: #{detail_branch_forward.13} parent=0 // pred_check
    _
  $region11: #{detail_branch_forward.13} parent=0 // pred_check_branch
    %13 = sbr.rel (0) target = $region13
  $region12: #{detail_branch_forward.13} parent=0 // pred_region
    _
  $region13: #{detail_branch_forward.13} parent=0 // pred_fallthru
    _
  %v15 = vld [vmem:[%s0] sm:$0xff]
  %v16 = vld [vmem:[%s0 + $0x8] sm:$0xff]
  %v17 = vld [vmem:[%s0 + $0x10] sm:$0xf]
  %v18 = vld [vmem:[%s0 + $0x14] sm:$0xff]
  %v19 = vld [vmem:[%s0 + $0x1c] sm:$0xff]
  %v20 = vld [vmem:[%s0 + $0x24] sm:$0xf]
  %v21 = vld [vmem:[%s1] sm:$0xf]
  %v22 = vld [vmem:[%s1 + $0x4] sm:$0xf]
  %v23 = vld [vmem:[%s1 + $0x8] sm:$0xf]
  %v24 = vld [vmem:[%s1 + $0xc] sm:$0xf]
  %v25 = vld [vmem:[%s1 + $0x10] sm:$0xf]
  %v26 = vld [vmem:[%s1 + $0x14] sm:$0xf]
  %v27 = vld [vmem:[%s1 + $0x18] sm:$0xf]
  %v28 = vld [vmem:[%s1 + $0x1c] sm:$0xf]
  %v29 = vld [vmem:[%s1 + $0x20] sm:$0xf]
  %v30 = vld [vmem:[%s1 + $0x24] sm:$0xf]
  %v31 = vld [vmem:[%s1 + $0x28] sm:$0xf]
  %v32 = vld [vmem:[%s1 + $0x2c] sm:$0xf]
  %v33 = vld [vmem:[%s1 + $0x30] sm:$0xf]
  %v34 = vld [vmem:[%s1 + $0x34] sm:$0xf]
  %v35 = vld [vmem:[%s1 + $0x38] sm:$0xf]
  %v36 = vld [vmem:[%s1 + $0x3c] sm:$0xf]
  %v37 = vld [vmem:[%s1 + $0x40] sm:$0xf]
  %v38 = vld [vmem:[%s1 + $0x44] sm:$0xf]
  %v39 = vld [vmem:[%s1 + $0x48] sm:$0xf]
  %v40 = vld [vmem:[%s1 + $0x4c] sm:$0xf]
  %v41 = vld [vmem:[%s1 + $0x50] sm:$0xf]
  %v42 = vld [vmem:[%s1 + $0x54] sm:$0xf]
  %v43 = vld [vmem:[%s1 + $0x58] sm:$0xf]
  %v44 = vld [vmem:[%s1 + $0x5c] sm:$0xf]
  %v45 = vld [vmem:[%s1 + $0x60] sm:$0xf]
  %v46 = vld [vmem:[%s1 + $0x64] sm:$0xf]
  %v47 = vld [vmem:[%s1 + $0x68] sm:$0xf]
  %v48 = vld [vmem:[%s1 + $0x6c] sm:$0xf]
  %v49 = vld [vmem:[%s1 + $0x70] sm:$0xf]
  %v50 = vld [vmem:[%s1 + $0x74] sm:$0xf]
  %v51 = vld [vmem:[%s1 + $0x78] sm:$0xf]
  %v52 = vld [vmem:[%s1 + $0x7c] sm:$0xf]
  %v53 = vld [vmem:[%s1 + $0x80] sm:$0xf]
  %v54 = vld [vmem:[%s1 + $0x84] sm:$0xf]
  %v55 = vld [vmem:[%s1 + $0x88] sm:$0xf]
  %v56 = vld [vmem:[%s1 + $0x8c] sm:$0xf]
  %v57 = vld [vmem:[%s1 + $0x90] sm:$0xf]
  %v58 = vld [vmem:[%s1 + $0x94] sm:$0xf]
  %v59 = vld [vmem:[%s1 + $0x98] sm:$0xf]
  %v60 = vld [vmem:[%s1 + $0x9c] sm:$0xf]
  %v61 = vld [vmem:[%s1 + $0xa0] sm:$0xf]
  %v62 = vld [vmem:[%s1 + $0xa4] sm:$0xf]
  %v63 = vld [vmem:[%s1 + $0xa8] sm:$0xf]
  %v64 = vld [vmem:[%s1 + $0xac] sm:$0xf]
  %v65 = vld [vmem:[%s1 + $0xb0] sm:$0xf]
  %v66 = vld [vmem:[%s1 + $0xb4] sm:$0xf]
  %v67 = vld [vmem:[%s1 + $0xb8] sm:$0xf]
  %v68 = vld [vmem:[%s1 + $0xbc] sm:$0xf]
  %v69 = vld [vmem:[%s1 + $0xc0] sm:$0xf]
  %v70 = vld [vmem:[%s1 + $0xc4] sm:$0xf]
  %v71 = vld [vmem:[%s1 + $0xc8] sm:$0xf]
  %v72 = vld [vmem:[%s1 + $0xcc] sm:$0xf]
  %v73 = vld [vmem:[%s1 + $0xd0] sm:$0xf]
  %v74 = vld [vmem:[%s1 + $0xd4] sm:$0xf]
  %v75 = vld [vmem:[%s1 + $0xd8] sm:$0xf]
  %v76 = vld [vmem:[%s1 + $0xdc] sm:$0xf]
  %v77 = vld [vmem:[%s1 + $0xe0] sm:$0xf]
  %v78 = vld [vmem:[%s1 + $0xe4] sm:$0xf]
  %v79 = vld [vmem:[%s1 + $0xe8] sm:$0xf]
  %v80 = vld [vmem:[%s1 + $0xec] sm:$0xf]
  %v81 = vld [vmem:[%s1 + $0xf0] sm:$0xf]
  %v82 = vld [vmem:[%s1 + $0xf4] sm:$0xf]
  %v83 = vld [vmem:[%s1 + $0xf8] sm:$0xf]
  %v84 = vld [vmem:[%s1 + $0xfc] sm:$0xf]
  %v85 = vld [vmem:[%s1 + $0x100] sm:$0xf]
  %v86 = vld [vmem:[%s1 + $0x104] sm:$0xf]
  %v87 = vld [vmem:[%s1 + $0x108] sm:$0xf]
  %v88 = vld [vmem:[%s1 + $0x10c] sm:$0xf]
  %v89 = vld [vmem:[%s1 + $0x110] sm:$0xf]
  %v90 = vld [vmem:[%s1 + $0x114] sm:$0xf]
  %v91 = vld [vmem:[%s1 + $0x118] sm:$0xf]
  %v92 = vld [vmem:[%s1 + $0x11c] sm:$0xf]
  %v93 = vld [vmem:[%s2] sm:$0x1]
  %v95 = vlaneseq
  %v96 = vshrl.u32 %v95, 7
  %v97 = vsub.s32 0, %v96
  %v98 = vrot.slane %v93, %v97
  %v106 = vunpack.c.l.b16 %v15
  %v107 = vunpack.c.h.b16 %v15
  %v108 = vunpack.c.l.b16 %v16
  %v109 = vunpack.c.h.b16 %v16
  %v110 = vunpack.c.l.b16 %v17
  %v111 = vunpack.c.l.b16 %v18
  %v112 = vunpack.c.h.b16 %v18
  %v113 = vunpack.c.l.b16 %v19
  %v114 = vunpack.c.h.b16 %v19
  %v115 = vunpack.c.l.b16 %v20
  %v116 = vpack.c.b16 %v111, %v106
  %v117 = vpack.c.b16 %v112, %v107
  %v118 = vpack.c.b16 %v113, %v108
  %v119 = vpack.c.b16 %v114, %v109
  %v120 = vpack.c.b16 %v115, %v110
  %v197 = vunpack.c.l.b16 %v21
  %v198 = vunpack.c.l.b16 %v22
  %v199 = vunpack.c.l.b16 %v23
  %v200 = vunpack.c.l.b16 %v24
  %v201 = vunpack.c.l.b16 %v25
  %v202 = vunpack.c.l.b16 %v26
  %v203 = vunpack.c.l.b16 %v27
  %v204 = vunpack.c.l.b16 %v28
  %v205 = vunpack.c.l.b16 %v29
  %v206 = vunpack.c.l.b16 %v30
  %v207 = vunpack.c.l.b16 %v31
  %v208 = vunpack.c.l.b16 %v32
  %v209 = vunpack.c.l.b16 %v33
  %v210 = vunpack.c.l.b16 %v34
  %v211 = vunpack.c.l.b16 %v35
  %v212 = vunpack.c.l.b16 %v36
  %v213 = vunpack.c.l.b16 %v37
  %v214 = vunpack.c.l.b16 %v38
  %v215 = vunpack.c.l.b16 %v39
  %v216 = vunpack.c.l.b16 %v40
  %v217 = vunpack.c.l.b16 %v41
  %v218 = vunpack.c.l.b16 %v42
  %v219 = vunpack.c.l.b16 %v43
  %v220 = vunpack.c.l.b16 %v44
  %v221 = vunpack.c.l.b16 %v45
  %v222 = vunpack.c.l.b16 %v46
  %v223 = vunpack.c.l.b16 %v47
  %v224 = vunpack.c.l.b16 %v48
  %v225 = vunpack.c.l.b16 %v49
  %v226 = vunpack.c.l.b16 %v50
  %v227 = vunpack.c.l.b16 %v51
  %v228 = vunpack.c.l.b16 %v52
  %v229 = vunpack.c.l.b16 %v53
  %v230 = vunpack.c.l.b16 %v54
  %v231 = vunpack.c.l.b16 %v55
  %v232 = vunpack.c.l.b16 %v56
  %v233 = vunpack.c.l.b16 %v57
  %v234 = vunpack.c.l.b16 %v58
  %v235 = vunpack.c.l.b16 %v59
  %v236 = vunpack.c.l.b16 %v60
  %v237 = vunpack.c.l.b16 %v61
  %v238 = vunpack.c.l.b16 %v62
  %v239 = vunpack.c.l.b16 %v63
  %v240 = vunpack.c.l.b16 %v64
  %v241 = vunpack.c.l.b16 %v65
  %v242 = vunpack.c.l.b16 %v66
  %v243 = vunpack.c.l.b16 %v67
  %v244 = vunpack.c.l.b16 %v68
  %v245 = vunpack.c.l.b16 %v69
  %v246 = vunpack.c.l.b16 %v70
  %v247 = vunpack.c.l.b16 %v71
  %v248 = vunpack.c.l.b16 %v72
  %v249 = vunpack.c.l.b16 %v73
  %v250 = vunpack.c.l.b16 %v74
  %v251 = vunpack.c.l.b16 %v75
  %v252 = vunpack.c.l.b16 %v76
  %v253 = vunpack.c.l.b16 %v77
  %v254 = vunpack.c.l.b16 %v78
  %v255 = vunpack.c.l.b16 %v79
  %v256 = vunpack.c.l.b16 %v80
  %v257 = vunpack.c.l.b16 %v81
  %v258 = vunpack.c.l.b16 %v82
  %v259 = vunpack.c.l.b16 %v83
  %v260 = vunpack.c.l.b16 %v84
  %v261 = vunpack.c.l.b16 %v85
  %v262 = vunpack.c.l.b16 %v86
  %v263 = vunpack.c.l.b16 %v87
  %v264 = vunpack.c.l.b16 %v88
  %v265 = vunpack.c.l.b16 %v89
  %v266 = vunpack.c.l.b16 %v90
  %v267 = vunpack.c.l.b16 %v91
  %v268 = vunpack.c.l.b16 %v92
  %v269 = vpack.c.b16 %v198, %v197
  %v270 = vpack.c.b16 %v200, %v199
  %v271 = vpack.c.b16 %v202, %v201
  %v272 = vpack.c.b16 %v204, %v203
  %v273 = vpack.c.b16 %v206, %v205
  %v274 = vpack.c.b16 %v208, %v207
  %v275 = vpack.c.b16 %v210, %v209
  %v276 = vpack.c.b16 %v212, %v211
  %v277 = vpack.c.b16 %v214, %v213
  %v278 = vpack.c.b16 %v216, %v215
  %v279 = vpack.c.b16 %v218, %v217
  %v280 = vpack.c.b16 %v220, %v219
  %v281 = vpack.c.b16 %v222, %v221
  %v282 = vpack.c.b16 %v224, %v223
  %v283 = vpack.c.b16 %v226, %v225
  %v284 = vpack.c.b16 %v228, %v227
  %v285 = vpack.c.b16 %v230, %v229
  %v286 = vpack.c.b16 %v232, %v231
  %v287 = vpack.c.b16 %v234, %v233
  %v288 = vpack.c.b16 %v236, %v235
  %v289 = vpack.c.b16 %v238, %v237
  %v290 = vpack.c.b16 %v240, %v239
  %v291 = vpack.c.b16 %v242, %v241
  %v292 = vpack.c.b16 %v244, %v243
  %v293 = vpack.c.b16 %v246, %v245
  %v294 = vpack.c.b16 %v248, %v247
  %v295 = vpack.c.b16 %v250, %v249
  %v296 = vpack.c.b16 %v252, %v251
  %v297 = vpack.c.b16 %v254, %v253
  %v298 = vpack.c.b16 %v256, %v255
  %v299 = vpack.c.b16 %v258, %v257
  %v300 = vpack.c.b16 %v260, %v259
  %v301 = vpack.c.b16 %v262, %v261
  %v302 = vpack.c.b16 %v264, %v263
  %v303 = vpack.c.b16 %v266, %v265
  %v304 = vpack.c.b16 %v268, %v267
  %vm341 = vcmask 523264
  %v343 = vsel %vm341, %v120, 0
  %345 = vmatprep.subr.bf16.mxu0 0
  %346 = vmatpush1.bf16.msra.mxu0 %v269
  %347 = vmatprep.subr.bf16.mxu0 0
  %348 = vmatpush1.bf16.msra.mxu0 %v270
  %349 = vmatprep.subr.bf16.mxu0 0
  %350 = vmatpush1.bf16.msra.mxu0 %v271
  %351 = vmatprep.subr.bf16.mxu0 0
  %352 = vmatpush1.bf16.msra.mxu0 %v272
  %353 = vmatprep.subr.bf16.mxu0 0
  %354 = vmatpush1.bf16.msra.mxu0 %v273
  %355 = vmatprep.subr.bf16.mxu0 0
  %356 = vmatpush1.bf16.msra.mxu0 %v274
  %357 = vmatprep.subr.bf16.mxu0 0
  %358 = vmatpush1.bf16.msra.mxu0 %v275
  %359 = vmatprep.subr.bf16.mxu0 0
  %360 = vmatpush1.bf16.msra.mxu0 %v276
  %361 = vmatprep.subr.bf16.mxu0 0
  %362 = vmatpush1.bf16.msra.mxu0 %v277
  %363 = vmatprep.subr.bf16.mxu0 0
  %364 = vmatpush1.bf16.msra.mxu0 %v278
  %365 = vmatprep.subr.bf16.mxu0 0
  %366 = vmatpush1.bf16.msra.mxu0 %v279
  %367 = vmatprep.subr.bf16.mxu0 0
  %368 = vmatpush1.bf16.msra.mxu0 %v280
  %369 = vmatprep.subr.bf16.mxu0 0
  %370 = vmatpush1.bf16.msra.mxu0 %v281
  %371 = vmatprep.subr.bf16.mxu0 0
  %372 = vmatpush1.bf16.msra.mxu0 %v282
  %373 = vmatprep.subr.bf16.mxu0 0
  %374 = vmatpush1.bf16.msra.mxu0 %v283
  %375 = vmatprep.subr.bf16.mxu0 0
  %376 = vmatpush1.bf16.msra.mxu0 %v284
  %377 = vmatprep.mubr.bf16.mxu0 %v117
  %378 = vmatmul.mubr.bf16.gmra.mrb[0].mxu0 %v116
  %v379 = vpop.f32.mrb[0].mxu0
  %v380 = vadd.f32 %v98, %v379
  %v381 = vpop.f32.mrb[0].mxu0
  %v382 = vpop.f32.mrb[0].mxu0
  %v383 = vadd.f32 %v98, %v382
  %v384 = vpop.f32.mrb[0].mxu0
  %385 = vdwg.mxu0
  %386 = vmatprep.subr.bf16.mxu0 0
  %387 = vmatpush1.bf16.msra.mxu0 %v285
  %388 = vmatprep.subr.bf16.mxu0 0
  %389 = vmatpush1.bf16.msra.mxu0 %v286
  %390 = vmatprep.subr.bf16.mxu0 0
  %391 = vmatpush1.bf16.msra.mxu0 %v287
  %392 = vmatprep.subr.bf16.mxu0 0
  %393 = vmatpush1.bf16.msra.mxu0 %v288
  %394 = vmatprep.subr.bf16.mxu0 0
  %395 = vmatpush1.bf16.msra.mxu0 %v289
  %396 = vmatprep.subr.bf16.mxu0 0
  %397 = vmatpush1.bf16.msra.mxu0 %v290
  %398 = vmatprep.subr.bf16.mxu0 0
  %399 = vmatpush1.bf16.msra.mxu0 %v291
  %400 = vmatprep.subr.bf16.mxu0 0
  %401 = vmatpush1.bf16.msra.mxu0 %v292
  %402 = vmatprep.subr.bf16.mxu0 0
  %403 = vmatpush1.bf16.msra.mxu0 %v293
  %404 = vmatprep.subr.bf16.mxu0 0
  %405 = vmatpush1.bf16.msra.mxu0 %v294
  %406 = vmatprep.subr.bf16.mxu0 0
  %407 = vmatpush1.bf16.msra.mxu0 %v295
  %408 = vmatprep.subr.bf16.mxu0 0
  %409 = vmatpush1.bf16.msra.mxu0 %v296
  %410 = vmatprep.subr.bf16.mxu0 0
  %411 = vmatpush1.bf16.msra.mxu0 %v297
  %412 = vmatprep.subr.bf16.mxu0 0
  %413 = vmatpush1.bf16.msra.mxu0 %v298
  %414 = vmatprep.subr.bf16.mxu0 0
  %415 = vmatpush1.bf16.msra.mxu0 %v299
  %416 = vmatprep.subr.bf16.mxu0 0
  %417 = vmatpush1.bf16.msra.mxu0 %v300
  %418 = vmatprep.mubr.bf16.mxu0 %v119
  %419 = vmatmul.mubr.bf16.gmra.mrb[0].mxu0 %v118
  %v420 = vpop.f32.mrb[0].mxu0
  %v421 = vadd.f32 %v380, %v420
  %v422 = vpop.f32.mrb[0].mxu0
  %v423 = vpop.f32.mrb[0].mxu0
  %v424 = vadd.f32 %v383, %v423
  %v425 = vpop.f32.mrb[0].mxu0
  %426 = vdwg.mxu0
  %427 = vmatprep.subr.bf16.mxu0 0
  %428 = vmatpush1.bf16.msra.mxu0 %v301
  %429 = vmatprep.subr.bf16.mxu0 0
  %430 = vmatpush1.bf16.msra.mxu0 %v302
  %431 = vmatprep.subr.bf16.mxu0 0
  %432 = vmatpush1.bf16.msra.mxu0 %v303
  %433 = vmatprep.subr.bf16.mxu0 0
  %434 = vmatpush1.bf16.msra.mxu0 %v304
  %435 = vmatprep.subr.bf16.mxu0 0
  %436 = vmatpush1.bf16.msra.mxu0 0
  %437 = vmatprep.subr.bf16.mxu0 0
  %438 = vmatpush1.bf16.msra.mxu0 0
  %439 = vmatprep.subr.bf16.mxu0 0
  %440 = vmatpush1.bf16.msra.mxu0 0
  %441 = vmatprep.subr.bf16.mxu0 0
  %442 = vmatpush1.bf16.msra.mxu0 0
  %443 = vmatprep.subr.bf16.mxu0 0
  %444 = vmatpush1.bf16.msra.mxu0 0
  %445 = vmatprep.subr.bf16.mxu0 0
  %446 = vmatpush1.bf16.msra.mxu0 0
  %447 = vmatprep.subr.bf16.mxu0 0
  %448 = vmatpush1.bf16.msra.mxu0 0
  %449 = vmatprep.subr.bf16.mxu0 0
  %450 = vmatpush1.bf16.msra.mxu0 0
  %451 = vmatprep.subr.bf16.mxu0 0
  %452 = vmatpush1.bf16.msra.mxu0 0
  %453 = vmatprep.subr.bf16.mxu0 0
  %454 = vmatpush1.bf16.msra.mxu0 0
  %455 = vmatprep.subr.bf16.mxu0 0
  %456 = vmatpush1.bf16.msra.mxu0 0
  %457 = vmatprep.subr.bf16.mxu0 0
  %458 = vmatpush1.bf16.msra.mxu0 0
  %459 = vmatprep.mubr.bf16.mxu0 0
  %460 = vmatmul.mubr.bf16.gmra.mrb[0].mxu0 %v343
  %v461 = vpop.f32.mrb[0].mxu0
  %v462 = vadd.f32 %v421, %v461
  %v463 = vpop.f32.mrb[0].mxu0
  %v464 = vpop.f32.mrb[0].mxu0
  %v465 = vadd.f32 %v424, %v464
  %v466 = vpop.f32.mrb[0].mxu0
  %467 = vdwg.mxu0
  %v468 = vmax.f32 %v462, 0.0
  %v469 = vmax.f32 %v465, 0.0
  %v470 = vpack.c.bf16 %v469, %v468
  %v472 = vunpack.c.l.b16 %v470
  %v473 = vunpack.c.h.b16 %v470
  %v474 = vpack.c.b16 %v472, %v472
  %v475 = vpack.c.b16 %v473, %v473
  %478 = vst [vmem:[%s3] sm:$0xf] %v474
  %479 = vst [vmem:[%s3 + $0x4] sm:$0xf] %v475
  // Predicated region
  $region14: #{detail_branch_forward.13} parent=0 // pred_check
    _
  $region15: #{detail_branch_forward.13} parent=0 // pred_check_branch
    %481 = sbr.rel (0) target = $region17
  $region16: #{detail_branch_forward.13} parent=0 // pred_region
    _
  $region17: #{detail_branch_forward.13} parent=0 // pred_fallthru
    _
  // Predicated region
  $region18: #{detail_branch_forward.13} parent=0 // pred_check
    _
  $region19: #{detail_branch_forward.13} parent=0 // pred_check_branch
    %483 = sbr.rel (0) target = $region21
  $region20: #{detail_branch_forward.13} parent=0 // pred_region
    _
  $region21: #{detail_branch_forward.13} parent=0 // pred_fallthru
    _

</llo_original>
